<compile_context>
chip_gen: v7x
topology: tpu7x:2x2x1
jax: 0.10.0
libtpu: 0.0.40
codegen_flags: <defaults>
</compile_context>

<pallas_src>
import functools
import math

import jax
import jax.numpy as jnp
from jax.experimental import pallas as pl
from jax.experimental.pallas import tpu as pltpu


def _round_up(v, m):
    return ((v + m - 1) // m) * m


def deepgnn_kernel(a_ref, p_hbm, x0_hbm, w_ref, b_ref, g_ref, bt_ref,      # inputs
                   jk_ref,                                                 # output
                   x_ref, xw_ref, p_ref, acc_ref, sum_ref, sq_ref, sem,    # scratch
                   *, n_real, n_pad, tm, tk, eps):
    l = pl.program_id(0)      # layer (outermost, sequential)
    i = pl.program_id(1)      # node-row tile of A
    k = pl.program_id(2)      # reduction tile of A (innermost)
    ni = pl.num_programs(1)
    nk = pl.num_programs(2)

    layer_start = (i == 0) & (k == 0)

    # --- one-time staging (first grid step only): DMA the padded input activation and the
    #     mean-pool matrix straight from HBM into single resident VMEM buffers (no
    #     constant-index BlockSpec => no wasted double buffer), then emit the layer-0
    #     readout (mean pool of the raw input features). ---
    @pl.when((l == 0) & layer_start)
    def _():
        cp_x = pltpu.make_async_copy(x0_hbm, x_ref, sem.at[0])
        cp_p = pltpu.make_async_copy(p_hbm, p_ref, sem.at[1])
        cp_x.start()
        cp_p.start()
        cp_x.wait()
        cp_p.wait()
        jk_ref[0] = jnp.dot(p_ref[...], x_ref[...],
                            preferred_element_type=jnp.float32)

    # --- per-layer prologue: zero the cross-tile BatchNorm statistic accumulators. ---
    @pl.when(layer_start)
    def _():
        sum_ref[...] = jnp.zeros_like(sum_ref)
        sq_ref[...] = jnp.zeros_like(sq_ref)

    koff = pl.multiple_of(k * tk, tk)

    # --- just-in-time (x @ W_l) K-slice, spread over the i == 0 sweep so it hides under the
    #     A-tile DMA (A @ (x W) == (A @ x) @ W, so only A is streamed from HBM).  The result
    #     is stored in bf16: halves the resident buffer and feeds the MXU natively.
    #     Ordering: this read of x_ref happens before the pre-BN overwrite below, so the old
    #     (previous layer) activation is always what feeds x@W, even when ni == nk == 1. ---
    @pl.when(i == 0)
    def _():
        xw_ref[pl.ds(koff, tk), :] = jnp.dot(
            x_ref[pl.ds(koff, tk), :], w_ref[0],
            preferred_element_type=jnp.float32).astype(xw_ref.dtype)

    # --- tiled, pipelined aggregation:  acc[i] += A[i, k] @ (x W_l)[k]
    #     (bf16 x bf16 on the MXU, f32 accumulation; no f32 upcast of the streamed A tile). ---
    @pl.when(k == 0)
    def _():
        acc_ref[...] = jnp.zeros_like(acc_ref)

    acc_ref[...] += jnp.dot(a_ref[...], xw_ref[pl.ds(koff, tk), :],
                            preferred_element_type=jnp.float32)

    # --- end of the K reduction for this row tile: add bias, stash the pre-BN rows back
    #     into the resident activation buffer (old rows are dead once their x@W slice
    #     exists), and accumulate masked BatchNorm statistics (padded nodes excluded). ---
    @pl.when(k == nk - 1)
    def _():
        h = acc_ref[...] + b_ref[0]                                  # [tm, Hp], f32
        roff = pl.multiple_of(i * tm, tm)
        x_ref[pl.ds(roff, tm), :] = h
        rows = roff + jax.lax.broadcasted_iota(jnp.int32, (tm, 1), 0)
        valid = (rows < n_real).astype(jnp.float32)
        hm = h * valid
        sum_ref[...] += jnp.sum(hm, axis=0, keepdims=True)
        sq_ref[...] += jnp.sum(hm * hm, axis=0, keepdims=True)

    # --- end of the layer: fused BatchNorm (one scale/shift FMA) + ReLU, explicit zeroing of
    #     the padded rows, and the per-graph mean-pool readout for JumpingKnowledge. ---
    @pl.when((i == ni - 1) & (k == nk - 1))
    def _():
        inv_n = 1.0 / float(n_real)
        mean = sum_ref[...] * inv_n                                  # [1, Hp]
        var = jnp.maximum(sq_ref[...] * inv_n - mean * mean, 0.0)    # biased var (train mode)
        scale = g_ref[0] * jax.lax.rsqrt(var + eps)
        shift = bt_ref[0] - mean * scale
        rows = jax.lax.broadcasted_iota(jnp.int32, (n_pad, 1), 0)
        vmask = (rows < n_real).astype(jnp.float32)
        x_new = jnp.maximum(x_ref[...] * scale + shift, 0.0) * vmask  # BN + ReLU + pad-zero
        x_ref[...] = x_new
        jk_ref[l + 1] = jnp.dot(p_ref[...], x_new,
                                preferred_element_type=jnp.float32)


def _default_block_sizes():
    """Chip-aware A-tile defaults: larger K tiles on v7x to amortize per-step overhead."""
    try:
        kind = jax.devices()[0].device_kind.lower()
    except Exception:
        kind = ""
    if "v7" in kind:
        return 512, 1024        # ~1 MiB bf16 A tile per grid step at ~3.2 TB/s HBM
    return 512, 512


def _vmem_limit_bytes(n_pad, hp, gp, tm, tk, layers):
    """Scoped-VMEM limit derived from the actual resident + pipelined buffer sizes."""
    f32, bf16 = 4, 2
    resident = (n_pad * hp * f32          # x (resident activation)
                + n_pad * hp * bf16       # x @ W (bf16)
                + gp * n_pad * f32        # pool matrix P
                + tm * hp * f32           # per-row-tile accumulator
                + 2 * 8 * hp * f32)       # BN sum / sum-of-squares (sublane-padded)
    pipelined = 2 * (tm * tk * bf16                     # A tiles, double-buffered
                     + hp * hp * f32 + 3 * 8 * hp * f32)  # per-layer W / b / gamma / beta
    out = 2 * (layers + 1) * gp * hp * f32              # jk output block
    need = resident + pipelined + out + (4 << 20)       # DMA/internal headroom
    return int(min(max(need, 32 << 20), 128 << 20))


def deepgnn_forward(x, edge_index, edge_attr, batch, params, *, num_graphs,
                    block_m=None, block_k=None):
    """DeepGNN.forward with jk='cat': returns (jk_output [G, (L+1)*H], num_layers)."""
    N, H = x.shape
    L = params["W"].shape[0]
    G = num_graphs

    if block_m is None or block_k is None:
        dm, dk = _default_block_sizes()
        block_m = block_m or dm
        block_k = block_k or dk

    # ---- padded / tiled geometry (block_m, block_k must be multiples of 128) ----------
    Hp = _round_up(H, 128)                 # lane-dense feature width
    Gp = _round_up(G, 8)                   # sublane-aligned readout rows
    n128 = _round_up(N, 128)
    tm = min(block_m, n128)                # A row tile
    tk = min(block_k, n128)                # A reduction tile
    N_pad = _round_up(N, math.lcm(tm, tk))

    # ---- glue (outside the kernel): dense weighted adjacency with self loops (bf16)
    #      and the per-graph mean-pool matrix.  TODO(synk): the O(N^2) densification of
    #      edge_index stays in plain JAX; a sparse/paged A stream is out of scope here. ----
    src, dst = edge_index[0], edge_index[1]
    A = jnp.zeros((N_pad, N_pad), jnp.float32)
    A = A.at[dst, src].add(edge_attr.astype(jnp.float32))
    A = A.at[jnp.arange(N), jnp.arange(N)].add(1.0)          # self loops for real nodes only
    A = A.astype(jnp.bfloat16)

    onehot = (batch[:, None] == jnp.arange(G)[None, :]).astype(jnp.float32)   # [N, G]
    counts = jnp.maximum(onehot.sum(axis=0), 1.0)
    P = jnp.zeros((Gp, N_pad), jnp.float32).at[:G, :N].set((onehot / counts[None, :]).T)

    xp = jnp.zeros((N_pad, Hp), jnp.float32).at[:N, :H].set(x)
    Wp = jnp.zeros((L, Hp, Hp), jnp.float32).at[:, :H, :H].set(params["W"])
    bp = jnp.zeros((L, 1, Hp), jnp.float32).at[:, :, :H].set(params["b"])
    gp = jnp.ones((L, 1, Hp), jnp.float32).at[:, :, :H].set(params["gamma"])
    btp = jnp.zeros((L, 1, Hp), jnp.float32).at[:, :, :H].set(params["beta"])

    kernel = functools.partial(deepgnn_kernel, n_real=N, n_pad=N_pad,
                               tm=tm, tk=tk, eps=1e-5)

    jk = pl.pallas_call(
        kernel,
        out_shape=jax.ShapeDtypeStruct((L + 1, Gp, Hp), jnp.float32),
        grid_spec=pltpu.PrefetchScalarGridSpec(
            num_scalar_prefetch=0,
            grid=(L, N_pad // tm, N_pad // tk),
            in_specs=[
                # A is the only HBM-streamed operand: (tm, tk) bf16 tiles, double-buffered.
                pl.BlockSpec((tm, tk), lambda l, i, k: (i, k)),
                # P and x0 are used exactly once: leave them in HBM, DMA once in-kernel.
                pl.BlockSpec(memory_space=pl.ANY),
                pl.BlockSpec(memory_space=pl.ANY),
                # per-layer params: small, re-fetched once per layer (prefetch of l+1).
                pl.BlockSpec((1, Hp, Hp), lambda l, i, k: (l, 0, 0)),
                pl.BlockSpec((1, 1, Hp), lambda l, i, k: (l, 0, 0)),
                pl.BlockSpec((1, 1, Hp), lambda l, i, k: (l, 0, 0)),
                pl.BlockSpec((1, 1, Hp), lambda l, i, k: (l, 0, 0)),
            ],
            out_specs=pl.BlockSpec((L + 1, Gp, Hp), lambda l, i, k: (0, 0, 0)),
            scratch_shapes=[
                pltpu.VMEM((N_pad, Hp), jnp.float32),    # resident activation x_l (f32)
                pltpu.VMEM((N_pad, Hp), jnp.bfloat16),   # x_l @ W_l (bf16 MXU operand)
                pltpu.VMEM((Gp, N_pad), jnp.float32),    # pool matrix P (single buffer)
                pltpu.VMEM((tm, Hp), jnp.float32),       # per-row-tile accumulator
                pltpu.VMEM((1, Hp), jnp.float32),        # BN sum
                pltpu.VMEM((1, Hp), jnp.float32),        # BN sum of squares
                pltpu.SemaphoreType.DMA((2,)),           # one-time x0 / P staging DMAs
            ],
        ),
        compiler_params=pltpu.CompilerParams(
            # All axes carry state through VMEM scratch -> must stay sequential.
            dimension_semantics=("arbitrary", "arbitrary", "arbitrary"),
            vmem_limit_bytes=_vmem_limit_bytes(N_pad, Hp, Gp, tm, tk, L),
        ),
    )(A, P, xp, Wp, bp, gp, btp)

    # JumpingKnowledge('cat'): concat the (L+1) graph readouts along the feature axis.
    out = jnp.transpose(jk[:, :G, :H], (1, 0, 2)).reshape(G, (L + 1) * H)
    return out, L


def _reference_forward(x, edge_index, edge_attr, batch, params, *, num_graphs, eps=1e-5):
    """Pure-JAX f32 reference of DeepGNN.forward (for a correctness sanity check)."""
    N = x.shape[0]
    G = num_graphs
    L = params["W"].shape[0]
    A = jnp.zeros((N, N), jnp.float32).at[edge_index[1], edge_index[0]].add(
        edge_attr.astype(jnp.float32)) + jnp.eye(N, dtype=jnp.float32)
    onehot = (batch[:, None] == jnp.arange(G)[None, :]).astype(jnp.float32)
    P = (onehot / jnp.maximum(onehot.sum(0), 1.0)[None, :]).T
    outs = [P @ x]
    for l in range(L):
        h = (A @ x) @ params["W"][l] + params["b"][l]
        mean = h.mean(axis=0, keepdims=True)
        var = ((h - mean) ** 2).mean(axis=0, keepdims=True)
        h = (h - mean) * jax.lax.rsqrt(var + eps)
        h = h * params["gamma"][l] + params["beta"][l]
        x = jnp.maximum(h, 0.0)
        outs.append(P @ x)
    return jnp.concatenate(outs, axis=-1)


if __name__ == "__main__":
    # Small deterministic example: 200 nodes (exercises N-padding + masked BN stats),
    # hid_dim=32, 2 graphs, 2 GNN layers, 800 weighted edges.
    N, H, G, L, E = 200, 32, 2, 2, 800

    key = jax.random.PRNGKey(0)
    k1, k2, k3, k4 = jax.random.split(key, 4)

    x = jax.random.normal(k1, (N, H), jnp.float32)
    edge_index = jax.random.randint(k2, (2, E), 0, N, dtype=jnp.int32)
    edge_attr = jax.random.uniform(k3, (E,), jnp.float32)
    batch = jnp.concatenate(
        [jnp.zeros(N // 2, jnp.int32), jnp.ones(N - N // 2, jnp.int32)]
    )

    # Deterministic synthetic parameters (BN init: gamma=1, beta=0).
    W = jax.random.normal(k4, (L, H, H), jnp.float32) / jnp.sqrt(H)
    b = jnp.zeros((L, 1, H), jnp.float32)
    gamma = jnp.ones((L, 1, H), jnp.float32)
    beta = jnp.zeros((L, 1, H), jnp.float32)
    params = dict(W=W, b=b, gamma=gamma, beta=beta)

    ref = _reference_forward(x, edge_index, edge_attr, batch, params, num_graphs=G)

    # (a) multi-tile grid (ni > 1, nk > 1): exercises cross-tile accumulation, the JIT x@W
    #     slices and the masked cross-tile BN statistics.
    out_a, num_layers = deepgnn_forward(x, edge_index, edge_attr, batch, params,
                                        num_graphs=G, block_m=128, block_k=128)
    out_a = jax.block_until_ready(out_a)
    assert out_a.shape == (G, (L + 1) * H), out_a.shape
    assert num_layers == L
    assert not bool(jnp.any(jnp.isnan(out_a)))     # mirrors the torch.isnan assert in forward
    err_a = float(jnp.max(jnp.abs(out_a - ref)))
    assert err_a < 5e-2, f"multi-tile max abs error vs f32 reference: {err_a}"

    # (b) single-tile grid (ni == nk == 1, default block sizes): regression test for the
    #     same-grid-step ordering of BN-stat zeroing / accumulation / finalize.
    out_b, _ = deepgnn_forward(x, edge_index, edge_attr, batch, params, num_graphs=G)
    out_b = jax.block_until_ready(out_b)
    assert out_b.shape == (G, (L + 1) * H), out_b.shape
    assert not bool(jnp.any(jnp.isnan(out_b)))
    err_b = float(jnp.max(jnp.abs(out_b - ref)))
    assert err_b < 5e-2, f"single-tile max abs error vs f32 reference: {err_b}"

    print("KERNEL_OK")
</pallas_src>

<mosaic_0001>
module attributes {stable_mosaic.version = 11 : i64} {
  func.func @deepgnn_kernel(%arg0: i32, %arg1: i32, %arg2: i32, %arg3: memref<128x128xbf16, #tpu.memory_space<vmem>>, %arg4: memref<8x256xf32, #tpu.memory_space<any>>, %arg5: memref<256x128xf32, #tpu.memory_space<any>>, %arg6: memref<1x128x128xf32, #tpu.memory_space<vmem>>, %arg7: memref<1x1x128xf32, #tpu.memory_space<vmem>>, %arg8: memref<1x1x128xf32, #tpu.memory_space<vmem>>, %arg9: memref<1x1x128xf32, #tpu.memory_space<vmem>>, %arg10: memref<3x8x128xf32, #tpu.memory_space<vmem>>, %arg11: memref<256x128xf32, #tpu.memory_space<vmem>>, %arg12: memref<256x128xbf16, #tpu.memory_space<vmem>>, %arg13: memref<8x256xf32, #tpu.memory_space<vmem>>, %arg14: memref<128x128xf32, #tpu.memory_space<vmem>>, %arg15: memref<1x128xf32, #tpu.memory_space<vmem>>, %arg16: memref<1x128xf32, #tpu.memory_space<vmem>>, %arg17: memref<2x!tpu.dma_semaphore, #tpu.memory_space<semaphore_mem>>) attributes {dimension_semantics = [#tpu.dimension_semantics<arbitrary>, #tpu.dimension_semantics<arbitrary>, #tpu.dimension_semantics<arbitrary>], iteration_bounds = array<i64: 2, 2, 2>, scalar_prefetch = 0 : i64, scratch_operands = 7 : i64, tpu.core_type = #tpu.core_type<tc>, window_params = [{transform_indices = @transform_0, window_bounds = array<i64: 128, 128>}, {}, {}, {transform_indices = @transform_3, window_bounds = array<i64: 1, 128, 128>}, {transform_indices = @transform_4, window_bounds = array<i64: 1, 1, 128>}, {transform_indices = @transform_5, window_bounds = array<i64: 1, 1, 128>}, {transform_indices = @transform_6, window_bounds = array<i64: 1, 1, 128>}, {pipeline_mode = #tpu.pipeline_mode<synchronous>, transform_indices = @transform_7, window_bounds = array<i64: 3, 8, 128>}]} {
    %c0_i32 = arith.constant 0 : i32
    %0 = arith.cmpi eq, %arg1, %c0_i32 : i32
    %c0_i32_0 = arith.constant 0 : i32
    %1 = arith.cmpi eq, %arg2, %c0_i32_0 : i32
    %2 = arith.andi %0, %1 : i1
    %c0_i32_1 = arith.constant 0 : i32
    %3 = arith.cmpi eq, %arg0, %c0_i32_1 : i32
    %4 = arith.andi %3, %2 : i1
    %5 = arith.extui %4 : i1 to i32
    %c0_i32_2 = arith.constant 0 : i32
    %6 = arith.cmpi ne, %5, %c0_i32_2 : i32
    scf.if %6 {
      %c0_i32_18 = arith.constant 0 : i32
      %32 = tpu.memref_slice %arg17[%c0_i32_18] : memref<2x!tpu.dma_semaphore, #tpu.memory_space<semaphore_mem>> -> memref<1x!tpu.dma_semaphore, #tpu.memory_space<semaphore_mem>>
      %33 = tpu.memref_squeeze %32 : memref<1x!tpu.dma_semaphore, #tpu.memory_space<semaphore_mem>> -> memref<!tpu.dma_semaphore, #tpu.memory_space<semaphore_mem>>
      tpu.enqueue_dma source(%arg5 : memref<256x128xf32, #tpu.memory_space<any>>) target(%arg11 : memref<256x128xf32, #tpu.memory_space<vmem>>) target_semaphore(%33 : memref<!tpu.dma_semaphore, #tpu.memory_space<semaphore_mem>>)
      %c1_i32_19 = arith.constant 1 : i32
      %34 = tpu.memref_slice %arg17[%c1_i32_19] : memref<2x!tpu.dma_semaphore, #tpu.memory_space<semaphore_mem>> -> memref<1x!tpu.dma_semaphore, #tpu.memory_space<semaphore_mem>>
      %35 = tpu.memref_squeeze %34 : memref<1x!tpu.dma_semaphore, #tpu.memory_space<semaphore_mem>> -> memref<!tpu.dma_semaphore, #tpu.memory_space<semaphore_mem>>
      tpu.enqueue_dma source(%arg4 : memref<8x256xf32, #tpu.memory_space<any>>) target(%arg13 : memref<8x256xf32, #tpu.memory_space<vmem>>) target_semaphore(%35 : memref<!tpu.dma_semaphore, #tpu.memory_space<semaphore_mem>>)
      %c0_i32_20 = arith.constant 0 : i32
      %36 = tpu.memref_slice %arg17[%c0_i32_20] : memref<2x!tpu.dma_semaphore, #tpu.memory_space<semaphore_mem>> -> memref<1x!tpu.dma_semaphore, #tpu.memory_space<semaphore_mem>>
      %37 = tpu.memref_squeeze %36 : memref<1x!tpu.dma_semaphore, #tpu.memory_space<semaphore_mem>> -> memref<!tpu.dma_semaphore, #tpu.memory_space<semaphore_mem>>
      tpu.wait_dma2 semaphore(%37 : memref<!tpu.dma_semaphore, #tpu.memory_space<semaphore_mem>>) src(%arg5 : memref<256x128xf32, #tpu.memory_space<any>>) dst(%arg11 : memref<256x128xf32, #tpu.memory_space<vmem>>)
      %c1_i32_21 = arith.constant 1 : i32
      %38 = tpu.memref_slice %arg17[%c1_i32_21] : memref<2x!tpu.dma_semaphore, #tpu.memory_space<semaphore_mem>> -> memref<1x!tpu.dma_semaphore, #tpu.memory_space<semaphore_mem>>
      %39 = tpu.memref_squeeze %38 : memref<1x!tpu.dma_semaphore, #tpu.memory_space<semaphore_mem>> -> memref<!tpu.dma_semaphore, #tpu.memory_space<semaphore_mem>>
      tpu.wait_dma2 semaphore(%39 : memref<!tpu.dma_semaphore, #tpu.memory_space<semaphore_mem>>) src(%arg4 : memref<8x256xf32, #tpu.memory_space<any>>) dst(%arg13 : memref<8x256xf32, #tpu.memory_space<vmem>>)
      %c0_22 = arith.constant 0 : index
      %c0_23 = arith.constant 0 : index
      %40 = vector.load %arg13[%c0_22, %c0_23] : memref<8x256xf32, #tpu.memory_space<vmem>>, vector<8x256xf32>
      %c0_24 = arith.constant 0 : index
      %c0_25 = arith.constant 0 : index
      %41 = vector.load %arg11[%c0_24, %c0_25] : memref<256x128xf32, #tpu.memory_space<vmem>>, vector<256x128xf32>
      %cst_26 = arith.constant dense<0.000000e+00> : vector<8x128xf32>
      %42 = tpu.matmul %40, %41, %cst_26 {dimension_numbers = #tpu.dot_dimension_numbers<[1], [0], [0], [1], [0, 0, 1, 1], [], []>} : vector<8x256xf32>, vector<256x128xf32>, vector<8x128xf32> -> vector<8x128xf32>
      %c0_27 = arith.constant 0 : index
      %c0_28 = arith.constant 0 : index
      %c0_29 = arith.constant 0 : index
      %43 = vector.load %arg10[%c0_27, %c0_28, %c0_29] : memref<3x8x128xf32, #tpu.memory_space<vmem>>, vector<1x8x128xf32>
      %44 = vector.shape_cast %43 : vector<1x8x128xf32> to vector<8x128xf32>
      %45 = vector.shape_cast %42 : vector<8x128xf32> to vector<1x8x128xf32>
      tpu.vector_store %arg10[%c0_27, %c0_28, %c0_29], %45 {strides = array<i32>} : memref<3x8x128xf32, #tpu.memory_space<vmem>>, vector<1x8x128xf32>,
    } else {
    }
    %7 = arith.extui %2 : i1 to i32
    %c0_i32_3 = arith.constant 0 : i32
    %8 = arith.cmpi ne, %7, %c0_i32_3 : i32
    scf.if %8 {
      %cst_18 = arith.constant 0.000000e+00 : f32
      %32 = vector.broadcast %cst_18 : f32 to vector<1x128xf32>
      %c0_19 = arith.constant 0 : index
      %c0_20 = arith.constant 0 : index
      %33 = vector.load %arg15[%c0_19, %c0_20] : memref<1x128xf32, #tpu.memory_space<vmem>>, vector<1x128xf32>
      tpu.vector_store %arg15[%c0_19, %c0_20], %32 {strides = array<i32>} : memref<1x128xf32, #tpu.memory_space<vmem>>, vector<1x128xf32>,
      %cst_21 = arith.constant 0.000000e+00 : f32
      %34 = vector.broadcast %cst_21 : f32 to vector<1x128xf32>
      %c0_22 = arith.constant 0 : index
      %c0_23 = arith.constant 0 : index
      %35 = vector.load %arg16[%c0_22, %c0_23] : memref<1x128xf32, #tpu.memory_space<vmem>>, vector<1x128xf32>
      tpu.vector_store %arg16[%c0_22, %c0_23], %34 {strides = array<i32>} : memref<1x128xf32, #tpu.memory_space<vmem>>, vector<1x128xf32>,
    } else {
    }
    %c128_i32 = arith.constant 128 : i32
    %9 = arith.muli %arg2, %c128_i32 : i32
    %10 = tpu.assume_multiple %9, 128 : i32
    %c0_i32_4 = arith.constant 0 : i32
    %11 = arith.cmpi eq, %arg1, %c0_i32_4 : i32
    %12 = arith.extui %11 : i1 to i32
    %c0_i32_5 = arith.constant 0 : i32
    %13 = arith.cmpi ne, %12, %c0_i32_5 : i32
    scf.if %13 {
      %32 = arith.index_cast %10 : i32 to index
      %c0_18 = arith.constant 0 : index
      %33 = vector.load %arg11[%32, %c0_18] : memref<256x128xf32, #tpu.memory_space<vmem>>, vector<128x128xf32>
      %c0_19 = arith.constant 0 : index
      %c0_20 = arith.constant 0 : index
      %c0_21 = arith.constant 0 : index
      %34 = vector.load %arg6[%c0_19, %c0_20, %c0_21] : memref<1x128x128xf32, #tpu.memory_space<vmem>>, vector<1x128x128xf32>
      %35 = vector.shape_cast %34 : vector<1x128x128xf32> to vector<128x128xf32>
      %cst_22 = arith.constant dense<0.000000e+00> : vector<128x128xf32>
      %36 = tpu.matmul %33, %35, %cst_22 {dimension_numbers = #tpu.dot_dimension_numbers<[1], [0], [0], [1], [0, 0, 1, 1], [], []>} : vector<128x128xf32>, vector<128x128xf32>, vector<128x128xf32> -> vector<128x128xf32>
      %37 = arith.truncf %36 : vector<128x128xf32> to vector<128x128xbf16>
      %38 = arith.index_cast %10 : i32 to index
      %c0_23 = arith.constant 0 : index
      %39 = vector.load %arg12[%38, %c0_23] : memref<256x128xbf16, #tpu.memory_space<vmem>>, vector<128x128xbf16>
      tpu.vector_store %arg12[%38, %c0_23], %37 {strides = array<i32>} : memref<256x128xbf16, #tpu.memory_space<vmem>>, vector<128x128xbf16>,
    } else {
    }
    %c0_i32_6 = arith.constant 0 : i32
    %14 = arith.cmpi eq, %arg2, %c0_i32_6 : i32
    %15 = arith.extui %14 : i1 to i32
    %c0_i32_7 = arith.constant 0 : i32
    %16 = arith.cmpi ne, %15, %c0_i32_7 : i32
    scf.if %16 {
      %cst_18 = arith.constant 0.000000e+00 : f32
      %32 = vector.broadcast %cst_18 : f32 to vector<128x128xf32>
      %c0_19 = arith.constant 0 : index
      %c0_20 = arith.constant 0 : index
      %33 = vector.load %arg14[%c0_19, %c0_20] : memref<128x128xf32, #tpu.memory_space<vmem>>, vector<128x128xf32>
      tpu.vector_store %arg14[%c0_19, %c0_20], %32 {strides = array<i32>} : memref<128x128xf32, #tpu.memory_space<vmem>>, vector<128x128xf32>,
    } else {
    }
    %c0 = arith.constant 0 : index
    %c0_8 = arith.constant 0 : index
    %17 = vector.load %arg14[%c0, %c0_8] : memref<128x128xf32, #tpu.memory_space<vmem>>, vector<128x128xf32>
    %c0_9 = arith.constant 0 : index
    %c0_10 = arith.constant 0 : index
    %18 = vector.load %arg3[%c0_9, %c0_10] : memref<128x128xbf16, #tpu.memory_space<vmem>>, vector<128x128xbf16>
    %19 = arith.index_cast %10 : i32 to index
    %c0_11 = arith.constant 0 : index
    %20 = vector.load %arg12[%19, %c0_11] : memref<256x128xbf16, #tpu.memory_space<vmem>>, vector<128x128xbf16>
    %cst = arith.constant dense<0.000000e+00> : vector<128x128xf32>
    %21 = tpu.matmul %18, %20, %cst {dimension_numbers = #tpu.dot_dimension_numbers<[1], [0], [0], [1], [0, 0, 1, 1], [], []>} : vector<128x128xbf16>, vector<128x128xbf16>, vector<128x128xf32> -> vector<128x128xf32>
    %22 = arith.addf %17, %21 : vector<128x128xf32>
    %c0_12 = arith.constant 0 : index
    %c0_13 = arith.constant 0 : index
    %23 = vector.load %arg14[%c0_12, %c0_13] : memref<128x128xf32, #tpu.memory_space<vmem>>, vector<128x128xf32>
    tpu.vector_store %arg14[%c0_12, %c0_13], %22 {strides = array<i32>} : memref<128x128xf32, #tpu.memory_space<vmem>>, vector<128x128xf32>,
    %c1_i32 = arith.constant 1 : i32
    %24 = arith.cmpi eq, %arg2, %c1_i32 : i32
    %25 = arith.extui %24 : i1 to i32
    %c0_i32_14 = arith.constant 0 : i32
    %26 = arith.cmpi ne, %25, %c0_i32_14 : i32
    scf.if %26 {
      %c0_18 = arith.constant 0 : index
      %c0_19 = arith.constant 0 : index
      %32 = vector.load %arg14[%c0_18, %c0_19] : memref<128x128xf32, #tpu.memory_space<vmem>>, vector<128x128xf32>
      %c0_20 = arith.constant 0 : index
      %c0_21 = arith.constant 0 : index
      %c0_22 = arith.constant 0 : index
      %33 = vector.load %arg7[%c0_20, %c0_21, %c0_22] : memref<1x1x128xf32, #tpu.memory_space<vmem>>, vector<1x1x128xf32>
      %34 = vector.shape_cast %33 : vector<1x1x128xf32> to vector<1x128xf32>
      %35 = vector.broadcast %34 : vector<1x128xf32> to vector<128x128xf32>
      %36 = arith.addf %32, %35 : vector<128x128xf32>
      %c128_i32_23 = arith.constant 128 : i32
      %37 = arith.muli %arg1, %c128_i32_23 : i32
      %38 = tpu.assume_multiple %37, 128 : i32
      %39 = arith.index_cast %38 : i32 to index
      %c0_24 = arith.constant 0 : index
      %40 = vector.load %arg11[%39, %c0_24] : memref<256x128xf32, #tpu.memory_space<vmem>>, vector<128x128xf32>
      tpu.vector_store %arg11[%39, %c0_24], %36 {strides = array<i32>} : memref<256x128xf32, #tpu.memory_space<vmem>>, vector<128x128xf32>,
      %41 = tpu.iota {dimensions = array<i32: 0>} : vector<128x1xi32>
      %42 = vector.broadcast %38 : i32 to vector<128x1xi32>
      %43 = arith.addi %42, %41 : vector<128x1xi32>
      %c200_i32 = arith.constant 200 : i32
      %44 = vector.broadcast %c200_i32 : i32 to vector<128x1xi32>
      %45 = arith.cmpi slt, %43, %44 : vector<128x1xi32>
      %46 = arith.extui %45 : vector<128x1xi1> to vector<128x1xi32>
      %47 = arith.sitofp %46 : vector<128x1xi32> to vector<128x1xf32>
      %48 = vector.broadcast %47 : vector<128x1xf32> to vector<128x128xf32>
      %49 = arith.mulf %36, %48 : vector<128x128xf32>
      %c0_25 = arith.constant 0 : index
      %c0_26 = arith.constant 0 : index
      %50 = vector.load %arg15[%c0_25, %c0_26] : memref<1x128xf32, #tpu.memory_space<vmem>>, vector<1x128xf32>
      %cst_27 = arith.constant dense<0.000000e+00> : vector<128xf32>
      %51 = vector.multi_reduction <add>, %49, %cst_27 [0] : vector<128x128xf32> to vector<128xf32>
      %52 = vector.shape_cast %51 : vector<128xf32> to vector<1x128xf32>
      %53 = arith.addf %50, %52 : vector<1x128xf32>
      %c0_28 = arith.constant 0 : index
      %c0_29 = arith.constant 0 : index
      %54 = vector.load %arg15[%c0_28, %c0_29] : memref<1x128xf32, #tpu.memory_space<vmem>>, vector<1x128xf32>
      tpu.vector_store %arg15[%c0_28, %c0_29], %53 {strides = array<i32>} : memref<1x128xf32, #tpu.memory_space<vmem>>, vector<1x128xf32>,
      %c0_30 = arith.constant 0 : index
      %c0_31 = arith.constant 0 : index
      %55 = vector.load %arg16[%c0_30, %c0_31] : memref<1x128xf32, #tpu.memory_space<vmem>>, vector<1x128xf32>
      %56 = arith.mulf %49, %49 : vector<128x128xf32>
      %cst_32 = arith.constant dense<0.000000e+00> : vector<128xf32>
      %57 = vector.multi_reduction <add>, %56, %cst_32 [0] : vector<128x128xf32> to vector<128xf32>
      %58 = vector.shape_cast %57 : vector<128xf32> to vector<1x128xf32>
      %59 = arith.addf %55, %58 : vector<1x128xf32>
      %c0_33 = arith.constant 0 : index
      %c0_34 = arith.constant 0 : index
      %60 = vector.load %arg16[%c0_33, %c0_34] : memref<1x128xf32, #tpu.memory_space<vmem>>, vector<1x128xf32>
      tpu.vector_store %arg16[%c0_33, %c0_34], %59 {strides = array<i32>} : memref<1x128xf32, #tpu.memory_space<vmem>>, vector<1x128xf32>,
    } else {
    }
    %c1_i32_15 = arith.constant 1 : i32
    %27 = arith.cmpi eq, %arg1, %c1_i32_15 : i32
    %c1_i32_16 = arith.constant 1 : i32
    %28 = arith.cmpi eq, %arg2, %c1_i32_16 : i32
    %29 = arith.andi %27, %28 : i1
    %30 = arith.extui %29 : i1 to i32
    %c0_i32_17 = arith.constant 0 : i32
    %31 = arith.cmpi ne, %30, %c0_i32_17 : i32
    scf.if %31 {
      %c0_18 = arith.constant 0 : index
      %c0_19 = arith.constant 0 : index
      %32 = vector.load %arg15[%c0_18, %c0_19] : memref<1x128xf32, #tpu.memory_space<vmem>>, vector<1x128xf32>
      %cst_20 = arith.constant 5.000000e-03 : f32
      %33 = vector.broadcast %cst_20 : f32 to vector<1x128xf32>
      %34 = arith.mulf %32, %33 : vector<1x128xf32>
      %c0_21 = arith.constant 0 : index
      %c0_22 = arith.constant 0 : index
      %35 = vector.load %arg16[%c0_21, %c0_22] : memref<1x128xf32, #tpu.memory_space<vmem>>, vector<1x128xf32>
      %cst_23 = arith.constant 5.000000e-03 : f32
      %36 = vector.broadcast %cst_23 : f32 to vector<1x128xf32>
      %37 = arith.mulf %35, %36 : vector<1x128xf32>
      %38 = arith.mulf %34, %34 : vector<1x128xf32>
      %39 = arith.subf %37, %38 : vector<1x128xf32>
      %cst_24 = arith.constant 0.000000e+00 : f32
      %40 = vector.broadcast %cst_24 : f32 to vector<1x128xf32>
      %41 = arith.maximumf %39, %40 : vector<1x128xf32>
      %c0_25 = arith.constant 0 : index
      %c0_26 = arith.constant 0 : index
      %c0_27 = arith.constant 0 : index
      %42 = vector.load %arg8[%c0_25, %c0_26, %c0_27] : memref<1x1x128xf32, #tpu.memory_space<vmem>>, vector<1x1x128xf32>
      %43 = vector.shape_cast %42 : vector<1x1x128xf32> to vector<1x128xf32>
      %cst_28 = arith.constant 9.99999974E-6 : f32
      %44 = vector.broadcast %cst_28 : f32 to vector<1x128xf32>
      %45 = arith.addf %41, %44 : vector<1x128xf32>
      %46 = math.rsqrt %45 : vector<1x128xf32>
      %47 = arith.mulf %43, %46 : vector<1x128xf32>
      %c0_29 = arith.constant 0 : index
      %c0_30 = arith.constant 0 : index
      %c0_31 = arith.constant 0 : index
      %48 = vector.load %arg9[%c0_29, %c0_30, %c0_31] : memref<1x1x128xf32, #tpu.memory_space<vmem>>, vector<1x1x128xf32>
      %49 = vector.shape_cast %48 : vector<1x1x128xf32> to vector<1x128xf32>
      %50 = arith.mulf %34, %47 : vector<1x128xf32>
      %51 = arith.subf %49, %50 : vector<1x128xf32>
      %52 = tpu.iota {dimensions = array<i32: 0>} : vector<256x1xi32>
      %c200_i32 = arith.constant 200 : i32
      %53 = vector.broadcast %c200_i32 : i32 to vector<256x1xi32>
      %54 = arith.cmpi slt, %52, %53 : vector<256x1xi32>
      %55 = arith.extui %54 : vector<256x1xi1> to vector<256x1xi32>
      %56 = arith.sitofp %55 : vector<256x1xi32> to vector<256x1xf32>
      %c0_32 = arith.constant 0 : index
      %c0_33 = arith.constant 0 : index
      %57 = vector.load %arg11[%c0_32, %c0_33] : memref<256x128xf32, #tpu.memory_space<vmem>>, vector<256x128xf32>
      %58 = vector.broadcast %47 : vector<1x128xf32> to vector<256x128xf32>
      %59 = arith.mulf %57, %58 : vector<256x128xf32>
      %60 = vector.broadcast %51 : vector<1x128xf32> to vector<256x128xf32>
      %61 = arith.addf %59, %60 : vector<256x128xf32>
      %cst_34 = arith.constant 0.000000e+00 : f32
      %62 = vector.broadcast %cst_34 : f32 to vector<256x128xf32>
      %63 = arith.maximumf %61, %62 : vector<256x128xf32>
      %64 = vector.broadcast %56 : vector<256x1xf32> to vector<256x128xf32>
      %65 = arith.mulf %63, %64 : vector<256x128xf32>
      %c0_35 = arith.constant 0 : index
      %c0_36 = arith.constant 0 : index
      %66 = vector.load %arg11[%c0_35, %c0_36] : memref<256x128xf32, #tpu.memory_space<vmem>>, vector<256x128xf32>
      tpu.vector_store %arg11[%c0_35, %c0_36], %65 {strides = array<i32>} : memref<256x128xf32, #tpu.memory_space<vmem>>, vector<256x128xf32>,
      %c0_37 = arith.constant 0 : index
      %c0_38 = arith.constant 0 : index
      %67 = vector.load %arg13[%c0_37, %c0_38] : memref<8x256xf32, #tpu.memory_space<vmem>>, vector<8x256xf32>
      %cst_39 = arith.constant dense<0.000000e+00> : vector<8x128xf32>
      %68 = tpu.matmul %67, %65, %cst_39 {dimension_numbers = #tpu.dot_dimension_numbers<[1], [0], [0], [1], [0, 0, 1, 1], [], []>} : vector<8x256xf32>, vector<256x128xf32>, vector<8x128xf32> -> vector<8x128xf32>
      %c1_i32_40 = arith.constant 1 : i32
      %69 = arith.addi %arg0, %c1_i32_40 : i32
      %70 = arith.index_cast %69 : i32 to index
      %c0_41 = arith.constant 0 : index
      %c0_42 = arith.constant 0 : index
      %71 = vector.load %arg10[%70, %c0_41, %c0_42] : memref<3x8x128xf32, #tpu.memory_space<vmem>>, vector<1x8x128xf32>
      %72 = vector.shape_cast %71 : vector<1x8x128xf32> to vector<8x128xf32>
      %73 = vector.shape_cast %68 : vector<8x128xf32> to vector<1x8x128xf32>
      tpu.vector_store %arg10[%70, %c0_41, %c0_42], %73 {strides = array<i32>} : memref<3x8x128xf32, #tpu.memory_space<vmem>>, vector<1x8x128xf32>,
    } else {
    }
    return
  }
  func.func @transform_0(%arg0: i32, %arg1: i32, %arg2: i32) -> (i32, i32) {
    %c0_i32 = arith.constant 0 : i32
    return %arg1, %arg2 : i32, i32
  }
  func.func @transform_3(%arg0: i32, %arg1: i32, %arg2: i32) -> (i32, i32, i32) {
    %c0_i32 = arith.constant 0 : i32
    %c0_i32_0 = arith.constant 0 : i32
    %c0_i32_1 = arith.constant 0 : i32
    return %arg0, %c0_i32, %c0_i32_0 : i32, i32, i32
  }
  func.func @transform_4(%arg0: i32, %arg1: i32, %arg2: i32) -> (i32, i32, i32) {
    %c0_i32 = arith.constant 0 : i32
    %c0_i32_0 = arith.constant 0 : i32
    %c0_i32_1 = arith.constant 0 : i32
    return %arg0, %c0_i32, %c0_i32_0 : i32, i32, i32
  }
  func.func @transform_5(%arg0: i32, %arg1: i32, %arg2: i32) -> (i32, i32, i32) {
    %c0_i32 = arith.constant 0 : i32
    %c0_i32_0 = arith.constant 0 : i32
    %c0_i32_1 = arith.constant 0 : i32
    return %arg0, %c0_i32, %c0_i32_0 : i32, i32, i32
  }
  func.func @transform_6(%arg0: i32, %arg1: i32, %arg2: i32) -> (i32, i32, i32) {
    %c0_i32 = arith.constant 0 : i32
    %c0_i32_0 = arith.constant 0 : i32
    %c0_i32_1 = arith.constant 0 : i32
    return %arg0, %c0_i32, %c0_i32_0 : i32, i32, i32
  }
  func.func @transform_7(%arg0: i32, %arg1: i32, %arg2: i32) -> (i32, i32, i32) {
    %c0_i32 = arith.constant 0 : i32
    %c0_i32_0 = arith.constant 0 : i32
    %c0_i32_1 = arith.constant 0 : i32
    %c0_i32_2 = arith.constant 0 : i32
    return %c0_i32, %c0_i32_0, %c0_i32_1 : i32, i32, i32
  }
}

</mosaic_0001>

<llo_original>
// kernel: tpu_custom_call.1
$region0: #{tpu_custom_call.1}
  #allocation0 [shape = 'u32[]', space=smem, size = 0x4, offset = 0x4, fixed_abs, tag = 'smem constant byte address 0x4 - core index']
  #allocation1 [shape = 'u32[144,128]{1,0:T(1,128)}', space=vmem, size = 0x12000, scoped, tag = 'internal scratch']
  #allocation2 [shape = 'f32[256,128]{1,0:T(8,128)}', space=vmem, size = 0x20000, scoped, tag = 'scratch operand']
  #allocation3 [shape = 'bf16[256,128]{1,0:T(16,128)(2,1)}', space=vmem, size = 0x10000, scoped, tag = 'scratch operand']
  #allocation4 [shape = 'f32[8,256]{1,0:T(8,128)}', space=vmem, size = 0x2000, scoped, tag = 'scratch operand']
  #allocation5 [shape = 'f32[128,128]{1,0:T(8,128)}', space=vmem, size = 0x10000, scoped, tag = 'scratch operand']
  #allocation6 [shape = 'f32[1,128]{1,0:T(1,128)}', space=vmem, size = 0x200, scoped, tag = 'scratch operand']
  #allocation7 [shape = 'f32[1,128]{1,0:T(1,128)}', space=vmem, size = 0x200, scoped, tag = 'scratch operand']
  #allocation8 [shape = 's32[2]{0}', space=sflag, size = 0x8, scoped, tag = 'scratch operand']
  #allocation15 [shape = 's32[]', space=sflag, size = 0x4, offset = 0, fixed_abs, tag = 'sflag constant byte address 0x0 - dummy sync flag']
  #allocation16 [shape = 's32[]', space=sflag, size = 0x4, offset = 0, fixed_abs, tag = 'sflag constant byte address 0x0 - dummy sync flag']
  #allocation17 [shape = 'u32[]', space=smem, size = 0x4, offset = 0x44, fixed_abs, tag = 'smem constant byte address 0x44 - assertion arg 0']
  #allocation18 [shape = 'u32[]', space=smem, size = 0x4, offset = 0x48, fixed_abs, tag = 'smem constant byte address 0x48 - assertion arg 1']
  #allocation19 [shape = 's32[]', space=sflag, size = 0x4, offset = 0, fixed_abs, tag = 'sflag constant byte address 0x0 - dummy sync flag']
  #allocation20 [shape = 's32[]', space=sflag, size = 0x4, offset = 0, fixed_abs, tag = 'sflag constant byte address 0x0 - dummy sync flag']
  %s0 = inlined_call_operand.hbm [shape: bf16[256,256], index: 0, kind: input, shape index: {}]
  %s1 = inlined_call_operand.hbm [shape: f32[8,256], index: 1, kind: input, shape index: {}]
  %s2 = inlined_call_operand.hbm [shape: f32[256,128], index: 2, kind: input, shape index: {}]
  %s3 = inlined_call_operand.hbm [shape: f32[2,128,128], index: 3, kind: input, shape index: {}]
  %s4 = inlined_call_operand.vmem [shape: f32[2,1,128], index: 4, kind: input, shape index: {}]
  %s5 = inlined_call_operand.vmem [shape: f32[2,1,128], index: 5, kind: input, shape index: {}]
  %s6 = inlined_call_operand.vmem [shape: f32[2,1,128], index: 6, kind: input, shape index: {}]
  %s7 = inlined_call_operand.hbm [shape: f32[3,8,128], index: 7, kind: output, shape index: {}]
  %s8 = sld [smem:[#allocation0]]
  $region93: #{tpu_custom_call.1} parent=0
    _
  %s10 = ssub.s32 1, %s8
  %s11 = scalar_select 0, %s10, %s8
  $region1: #{tpu_custom_call.1} parent=0
    #allocation9 [shape = 'u8[65536]{0}', space=vmem, size = 0x10000, scoped, tag = 'input window, operand 0']
    #allocation10 [shape = 's32[2]{0}', space=sflag, size = 0x8, scoped, tag = 'scoped memory for tpu_custom_call.1']
    #allocation11 [shape = 's32[2]{0}', space=sflag, size = 0x8, scoped, tag = 'scoped memory for tpu_custom_call.1']
    #allocation12 [shape = 'u8[131072]{0}', space=vmem, size = 0x20000, scoped, tag = 'input window, operand 3']
    #allocation13 [shape = 's32[2]{0}', space=sflag, size = 0x8, scoped, tag = 'scoped memory for tpu_custom_call.1']
    #allocation14 [shape = 'u8[12288]{0}', space=vmem, size = 0x3000, scoped, tag = 'output window, operand 0, single buffered']
    %12 = vsyncpa [#allocation10], 0
    %s13 = scalar_lea.sflag [#allocation10], 1
    %14 = vsyncpa %s13, 0
    %15 = vsyncpa [#allocation13], 0
    %s16 = scalar_lea.sflag [#allocation13], 1
    %17 = vsyncpa %s16, 0
    %18 = vsyncpa [#allocation11], 0
    loop: start=0, step=1, limit=10
    $region2: #{tpu_custom_call.1} parent=1 // loop_pre_header
      _
    $region3: #{tpu_custom_call.1} parent=1 // loop_header
      %s20 = sphi 0, %s24
      %p21 = scmp.ge.s32.totalorder %s20, 10
      %s27 = sphi 0, %s46
      %s28 = sphi 0, %s42
      %s29 = sphi 0, %s38
      %s30 = sphi 0, %s27
      %s31 = sphi 0, %s28
      %s32 = sphi 0, %s29
      %s33 = sphi 0, %s30
      %s34 = sphi 0, %s31
      %s35 = sphi 0, %s32
      %s51 = sphi 0, %s53
      %s54 = sphi 0, %s51
      %s55 = sphi 0, %s54
      %s71 = sphi 0, %s55
      %s77 = sphi 0, %s79
      %s80 = sphi 0, %s77
      %s81 = sphi 0, %s80
      %s97 = sphi 0, %s81
      %s103 = sphi 0, %s105
      %s106 = sphi 0, %s103
      %s107 = sphi 0, %s106
      %s123 = sphi 0, %s107
      %s129 = sphi 0, %s131
      %s132 = sphi 0, %s129
      %s133 = sphi 0, %s132
      %s149 = sphi 0, %s133
      %s155 = sphi 0, %s157
      %s158 = sphi 0, %s155
      %s159 = sphi 0, %s158
      %s175 = sphi 0, %s159
      %s179 = sphi 0, %s179
      %s181 = sphi 0, %s179
      %s182 = sphi 0, %s181
      %s196 = sphi 0, %s182
    $region4: #{tpu_custom_call.1} parent=1 // loop_header_branch
      %23 = sbr.rel (%p21) target = $region8
    $region5: #{tpu_custom_call.1} parent=1 // loop_body
      %s25 = ssub.s32 %s20, 1
      %s26 = ssub.s32 %s20, 2
      %s36 = sadd.s32 1, %s29
      %p37 = scmp.ge.s32.totalorder %s36, 2
      %s38 = scalar_select %p37, 0, %s36
      %s39 = sadd.s32 1, %s28
      %s40 = scalar_select %p37, %s39, %s28
      %p41 = scmp.ge.s32.totalorder %s40, 2
      %s42 = scalar_select %p41, 0, %s40
      %s43 = sadd.s32 1, %s27
      %s44 = scalar_select %p41, %s43, %s27
      %p45 = scmp.ge.s32.totalorder %s44, 2
      %s46 = scalar_select %p45, 0, %s44
      %s47 = ssub.s32 %s28, %s42
      %s48 = ssub.s32 %s29, %s38
      %s49 = sor.u32 %s47, %s48
      %p50 = scmp.eq.s32.totalorder %s49, 0
      %s52 = sadd.s32 %s51, 1
      %s53 = scalar_select %p50, %s51, %s52
      %p56 = pneg %p50
      %p57 = scmp.eq.s32.totalorder %s20, 7
      %p58 = por %p56, %p57
      %p59 = scmp.ne.s32.totalorder %s51, %s54
      %p60 = scmp.eq.s32.totalorder %s20, 0
      %p61 = por %p59, %p60
      %p62 = scmp.ne.s32.totalorder %s51, %s54
      %p63 = scmp.eq.s32.totalorder %s25, 7
      %p64 = por %p62, %p63
      %p65 = scmp.ne.s32.totalorder %s54, %s55
      %p66 = scmp.eq.s32.totalorder %s25, 0
      %p67 = por %p65, %p66
      %p68 = scmp.ne.s32.totalorder %s54, %s55
      %p69 = scmp.eq.s32.totalorder %s26, 7
      %p70 = por %p68, %p69
      %p72 = scmp.ne.s32.totalorder %s55, %s71
      %p73 = scmp.eq.s32.totalorder %s26, 0
      %p74 = por %p72, %p73
      %s75 = ssub.s32 %s27, %s46
      %p76 = scmp.eq.s32.totalorder %s75, 0
      %s78 = sadd.s32 %s77, 1
      %s79 = scalar_select %p76, %s77, %s78
      %p82 = pneg %p76
      %p83 = scmp.eq.s32.totalorder %s20, 7
      %p84 = por %p82, %p83
      %p85 = scmp.ne.s32.totalorder %s77, %s80
      %p86 = scmp.eq.s32.totalorder %s20, 0
      %p87 = por %p85, %p86
      %p88 = scmp.ne.s32.totalorder %s77, %s80
      %p89 = scmp.eq.s32.totalorder %s25, 7
      %p90 = por %p88, %p89
      %p91 = scmp.ne.s32.totalorder %s80, %s81
      %p92 = scmp.eq.s32.totalorder %s25, 0
      %p93 = por %p91, %p92
      %p94 = scmp.ne.s32.totalorder %s80, %s81
      %p95 = scmp.eq.s32.totalorder %s26, 7
      %p96 = por %p94, %p95
      %p98 = scmp.ne.s32.totalorder %s81, %s97
      %p99 = scmp.eq.s32.totalorder %s26, 0
      %p100 = por %p98, %p99
      %s101 = ssub.s32 %s27, %s46
      %p102 = scmp.eq.s32.totalorder %s101, 0
      %s104 = sadd.s32 %s103, 1
      %s105 = scalar_select %p102, %s103, %s104
      %p108 = pneg %p102
      %p109 = scmp.eq.s32.totalorder %s20, 7
      %p110 = por %p108, %p109
      %p111 = scmp.ne.s32.totalorder %s103, %s106
      %p112 = scmp.eq.s32.totalorder %s20, 0
      %p113 = por %p111, %p112
      %p114 = scmp.ne.s32.totalorder %s103, %s106
      %p115 = scmp.eq.s32.totalorder %s25, 7
      %p116 = por %p114, %p115
      %p117 = scmp.ne.s32.totalorder %s106, %s107
      %p118 = scmp.eq.s32.totalorder %s25, 0
      %p119 = por %p117, %p118
      %p120 = scmp.ne.s32.totalorder %s106, %s107
      %p121 = scmp.eq.s32.totalorder %s26, 7
      %p122 = por %p120, %p121
      %p124 = scmp.ne.s32.totalorder %s107, %s123
      %p125 = scmp.eq.s32.totalorder %s26, 0
      %p126 = por %p124, %p125
      %s127 = ssub.s32 %s27, %s46
      %p128 = scmp.eq.s32.totalorder %s127, 0
      %s130 = sadd.s32 %s129, 1
      %s131 = scalar_select %p128, %s129, %s130
      %p134 = pneg %p128
      %p135 = scmp.eq.s32.totalorder %s20, 7
      %p136 = por %p134, %p135
      %p137 = scmp.ne.s32.totalorder %s129, %s132
      %p138 = scmp.eq.s32.totalorder %s20, 0
      %p139 = por %p137, %p138
      %p140 = scmp.ne.s32.totalorder %s129, %s132
      %p141 = scmp.eq.s32.totalorder %s25, 7
      %p142 = por %p140, %p141
      %p143 = scmp.ne.s32.totalorder %s132, %s133
      %p144 = scmp.eq.s32.totalorder %s25, 0
      %p145 = por %p143, %p144
      %p146 = scmp.ne.s32.totalorder %s132, %s133
      %p147 = scmp.eq.s32.totalorder %s26, 7
      %p148 = por %p146, %p147
      %p150 = scmp.ne.s32.totalorder %s133, %s149
      %p151 = scmp.eq.s32.totalorder %s26, 0
      %p152 = por %p150, %p151
      %s153 = ssub.s32 %s27, %s46
      %p154 = scmp.eq.s32.totalorder %s153, 0
      %s156 = sadd.s32 %s155, 1
      %s157 = scalar_select %p154, %s155, %s156
      %p160 = pneg %p154
      %p161 = scmp.eq.s32.totalorder %s20, 7
      %p162 = por %p160, %p161
      %p163 = scmp.ne.s32.totalorder %s155, %s158
      %p164 = scmp.eq.s32.totalorder %s20, 0
      %p165 = por %p163, %p164
      %p166 = scmp.ne.s32.totalorder %s155, %s158
      %p167 = scmp.eq.s32.totalorder %s25, 7
      %p168 = por %p166, %p167
      %p169 = scmp.ne.s32.totalorder %s158, %s159
      %p170 = scmp.eq.s32.totalorder %s25, 0
      %p171 = por %p169, %p170
      %p172 = scmp.ne.s32.totalorder %s158, %s159
      %p173 = scmp.eq.s32.totalorder %s26, 7
      %p174 = por %p172, %p173
      %p176 = scmp.ne.s32.totalorder %s159, %s175
      %p177 = scmp.eq.s32.totalorder %s26, 0
      %p178 = por %p176, %p177
      %s180 = sadd.s32 %s179, 1
      %p183 = scmp.eq.s32.totalorder %s20, 7
      %p184 = scmp.ne.s32.totalorder %s179, %s181
      %p185 = scmp.eq.s32.totalorder %s20, 0
      %p186 = por %p184, %p185
      %p187 = scmp.ne.s32.totalorder %s179, %s181
      %p188 = scmp.eq.s32.totalorder %s25, 7
      %p189 = por %p187, %p188
      %p190 = scmp.ne.s32.totalorder %s181, %s182
      %p191 = scmp.eq.s32.totalorder %s25, 0
      %p192 = por %p190, %p191
      %p193 = scmp.ne.s32.totalorder %s181, %s182
      %p194 = scmp.eq.s32.totalorder %s26, 7
      %p195 = por %p193, %p194
      %p197 = scmp.ne.s32.totalorder %s182, %s196
      %p198 = scmp.eq.s32.totalorder %s26, 0
      %p199 = por %p197, %p198
      %p200 = scmp.le.s32.totalorder 1, %s20
      %p201 = scmp.lt.s32.totalorder %s20, 9
      %p202 = pnand %p200, %p201
      %p203 = pneg %p202
      // Predicated region
      $region9: #{tpu_custom_call.1} parent=5 // pred_check
        _
      $region10: #{tpu_custom_call.1} parent=5 // pred_check_branch
        %205 = sbr.rel (%p202) target = $region12
      $region11: #{tpu_custom_call.1} parent=5 // pred_region
        %s206 = ssub.s32 %s20, 1
      $region12: #{tpu_custom_call.1} parent=5 // pred_fallthru
        _
      %p207 = scmp.lt.s32.totalorder %s20, 8
      // Predicated region
      $region13: #{tpu_custom_call.1} parent=5 // pred_check
        %p208 = pneg %p207
      $region14: #{tpu_custom_call.1} parent=5 // pred_check_branch
        %210 = sbr.rel (%p208) target = $region16
      $region15: #{tpu_custom_call.1} parent=5 // pred_region
        // Predicated region
        $region17: #{tpu_custom_call.1} parent=15 // pred_check
          %p211 = pneg %p61
        $region18: #{tpu_custom_call.1} parent=15 // pred_check_branch
          %213 = sbr.rel (%p211) target = $region20
        $region19: #{tpu_custom_call.1} parent=15 // pred_region
          %s214 = sand.u32 %s51, 1
          %s215 = scalar_lea.sflag [#allocation10], %s214
          %s216 = sand.u32 %s51, 1
          %s217 = smul.addr %s216, 64
          %s218 = scalar_lea.vmem [#allocation9], %s217
          %s219 = smul.u32 16, %s28
          %s221 = ssub.s32 1024, 1024
          %222 = vsyncadd %s215, %s221
          %s223 = smul.addr %s219, 2
          %s224 = sadd.s32 %s29, %s223
          %s225 = smul.addr %s224, 64
          %s226 = scalar_lea.hbm %s0, %s225
          %s227 = sshll.u32 %s218, 4
          %s228 = int_to_ptr.vmem [resolvable:$true] %s227
          %233 = dma.hbm_to_vmem [thread:$0]  %s226, 1024, %s228, %s215, 128, 64, 4
        $region20: #{tpu_custom_call.1} parent=15 // pred_fallthru
          _
        // Predicated region
        $region21: #{tpu_custom_call.1} parent=15 // pred_check
          %p234 = pneg %p87
        $region22: #{tpu_custom_call.1} parent=15 // pred_check_branch
          %236 = sbr.rel (%p234) target = $region24
        $region23: #{tpu_custom_call.1} parent=15 // pred_region
          %s237 = sand.u32 %s77, 1
          %s238 = scalar_lea.sflag [#allocation13], %s237
          %s239 = sand.u32 %s77, 1
          %s240 = smul.addr %s239, 128
          %s241 = scalar_lea.vmem [#allocation12], %s240
          %s243 = ssub.s32 2048, 2048
          %244 = vsyncadd %s238, %s243
          %s245 = smul.addr %s27, 16
          %s246 = smul.addr %s245, 128
          %s247 = scalar_lea.hbm %s3, %s246
          %s248 = sshll.u32 %s241, 4
          %s249 = int_to_ptr.vmem [resolvable:$true] %s248
          %254 = dma.hbm_to_vmem [thread:$0]  %s247, 2048, %s249, %s238, 128, 128, 8
        $region24: #{tpu_custom_call.1} parent=15 // pred_fallthru
          _
        // Predicated region
        $region25: #{tpu_custom_call.1} parent=15 // pred_check
          %p255 = pneg %p113
        $region26: #{tpu_custom_call.1} parent=15 // pred_check_branch
          %257 = sbr.rel (%p255) target = $region28
        $region27: #{tpu_custom_call.1} parent=15 // pred_region
          %p258 = scmp.lt.s32.totalorder %s27, 1
          %s259 = scalar_select %p258, %s27, 1
          %s260 = scalar_lea.vmem %s4, %s259
        $region28: #{tpu_custom_call.1} parent=15 // pred_fallthru
          _
        // Predicated region
        $region29: #{tpu_custom_call.1} parent=15 // pred_check
          %p261 = pneg %p139
        $region30: #{tpu_custom_call.1} parent=15 // pred_check_branch
          %263 = sbr.rel (%p261) target = $region32
        $region31: #{tpu_custom_call.1} parent=15 // pred_region
          %p264 = scmp.lt.s32.totalorder %s27, 1
          %s265 = scalar_select %p264, %s27, 1
          %s266 = scalar_lea.vmem %s5, %s265
        $region32: #{tpu_custom_call.1} parent=15 // pred_fallthru
          _
        // Predicated region
        $region33: #{tpu_custom_call.1} parent=15 // pred_check
          %p267 = pneg %p165
        $region34: #{tpu_custom_call.1} parent=15 // pred_check_branch
          %269 = sbr.rel (%p267) target = $region36
        $region35: #{tpu_custom_call.1} parent=15 // pred_region
          %p270 = scmp.lt.s32.totalorder %s27, 1
          %s271 = scalar_select %p270, %s27, 1
          %s272 = scalar_lea.vmem %s6, %s271
        $region36: #{tpu_custom_call.1} parent=15 // pred_fallthru
          _
      $region16: #{tpu_custom_call.1} parent=5 // pred_fallthru
        _
      %p273 = scmp.le.s32.totalorder 1, %s20
      %p274 = scmp.lt.s32.totalorder %s20, 9
      %p275 = pnand %p273, %p274
      %p276 = pneg %p275
      // Predicated region
      $region37: #{tpu_custom_call.1} parent=5 // pred_check
        _
      $region38: #{tpu_custom_call.1} parent=5 // pred_check_branch
        %278 = sbr.rel (%p275) target = $region40
      $region39: #{tpu_custom_call.1} parent=5 // pred_region
        %s279 = ssub.s32 %s20, 1
        %s280 = sand.u32 %s54, 1
        %s281 = scalar_lea.sflag [#allocation10], %s280
        %s282 = sand.u32 %s54, 1
        %s283 = smul.addr %s282, 64
        %s284 = scalar_lea.vmem [#allocation9], %s283
        // Predicated region
        $region41: #{tpu_custom_call.1} parent=39 // pred_check
          %p285 = pneg %p67
        $region42: #{tpu_custom_call.1} parent=39 // pred_check_branch
          %287 = sbr.rel (%p285) target = $region44
        $region43: #{tpu_custom_call.1} parent=39 // pred_region
          %288 = dma.done %s281, 1024
        $region44: #{tpu_custom_call.1} parent=39 // pred_fallthru
          _
        %s289 = sand.u32 %s80, 1
        %s290 = scalar_lea.sflag [#allocation13], %s289
        %s291 = sand.u32 %s80, 1
        %s292 = smul.addr %s291, 128
        %s293 = scalar_lea.vmem [#allocation12], %s292
        // Predicated region
        $region45: #{tpu_custom_call.1} parent=39 // pred_check
          %p294 = pneg %p93
        $region46: #{tpu_custom_call.1} parent=39 // pred_check_branch
          %296 = sbr.rel (%p294) target = $region48
        $region47: #{tpu_custom_call.1} parent=39 // pred_region
          %297 = dma.done %s290, 2048
        $region48: #{tpu_custom_call.1} parent=39 // pred_fallthru
          _
        %s298 = sand.u32 %s54, 1
        %s299 = scalar_lea.sflag [#allocation10], %s298
        %s300 = sand.u32 %s54, 1
        %s301 = smul.addr %s300, 64
        %s302 = scalar_lea.vmem [#allocation9], %s301
        %p303 = pneg %p67
        %p304 = pneg %p64
        %s305 = sand.u32 %s80, 1
        %s306 = scalar_lea.sflag [#allocation13], %s305
        %s307 = sand.u32 %s80, 1
        %s308 = smul.addr %s307, 128
        %s309 = scalar_lea.vmem [#allocation12], %s308
        %p310 = pneg %p93
        %p311 = pneg %p90
        %p312 = scmp.lt.s32.totalorder %s30, 1
        %s313 = scalar_select %p312, %s30, 1
        %s314 = scalar_lea.vmem %s4, %s313
        %p315 = pneg %p119
        %p316 = pneg %p116
        %p317 = scmp.lt.s32.totalorder %s30, 1
        %s318 = scalar_select %p317, %s30, 1
        %s319 = scalar_lea.vmem %s5, %s318
        %p320 = pneg %p145
        %p321 = pneg %p142
        %p322 = scmp.lt.s32.totalorder %s30, 1
        %s323 = scalar_select %p322, %s30, 1
        %s324 = scalar_lea.vmem %s6, %s323
        %p325 = pneg %p171
        %p326 = pneg %p168
        %p327 = pneg %p192
        %p328 = pneg %p189
        %s329 = smul.u32 16, %s31
        %p330 = scmp.lt.s32.totalorder %s30, 1
        %s331 = scalar_select %p330, %s30, 1
        %s332 = scalar_lea.vmem %s4, %s331
        %p333 = scmp.lt.s32.totalorder %s30, 1
        %s334 = scalar_select %p333, %s30, 1
        %s335 = scalar_lea.vmem %s5, %s334
        %p336 = scmp.lt.s32.totalorder %s30, 1
        %s337 = scalar_select %p336, %s30, 1
        %s338 = scalar_lea.vmem %s6, %s337
        %p340 = scmp.eq.s32.totalorder %s31, 0
        %p341 = scmp.eq.s32.totalorder %s32, 0
        %p342 = pnand %p340, %p341
        %p343 = pneg %p342
        %p344 = scmp.eq.s32.totalorder %s30, 0
        %p345 = pnand %p344, %p343
        %p346 = pneg %p345
        // Predicated region
        $region49: #{tpu_custom_call.1} parent=39 // pred_check
          _
        $region50: #{tpu_custom_call.1} parent=39 // pred_check_branch
          %348 = sbr.rel (%p345) target = $region52
        $region51: #{tpu_custom_call.1} parent=39 // pred_region
          // Predicated region
          $region53: #{tpu_custom_call.1} parent=51 // pred_check
            _
          $region54: #{tpu_custom_call.1} parent=51 // pred_check_branch
            %350 = sbr.rel target = $region56
          $region55: #{tpu_custom_call.1} parent=51 // pred_region
            %351 = sst [smem:[#allocation17]] [#allocation16]
            %352 = sst [smem:[#allocation18]] [#allocation15]
          $region56: #{tpu_custom_call.1} parent=51 // pred_fallthru
            _
          %354 = shalt.err (0)
          %s356 = sshll.u32 [#allocation2], 4
          %s357 = int_to_ptr.vmem [resolvable:$true] %s356
          %359 = dma.hbm_to_vmem [thread:$0]  %s2, 4096, %s357, [#allocation8]
          %s360 = scalar_lea.sflag [#allocation8], 1
          // Predicated region
          $region57: #{tpu_custom_call.1} parent=51 // pred_check
            _
          $region58: #{tpu_custom_call.1} parent=51 // pred_check_branch
            %362 = sbr.rel target = $region60
          $region59: #{tpu_custom_call.1} parent=51 // pred_region
            %363 = sst [smem:[#allocation17]] [#allocation20]
            %364 = sst [smem:[#allocation18]] [#allocation19]
          $region60: #{tpu_custom_call.1} parent=51 // pred_fallthru
            _
          %366 = shalt.err (0)
          %s368 = sshll.u32 [#allocation4], 4
          %s369 = int_to_ptr.vmem [resolvable:$true] %s368
          %371 = dma.hbm_to_vmem [thread:$0]  %s1, 256, %s369, %s360
          %s372 = smul.u32 256, 1
          %s373 = sshll.u32 %s372, 4
          %374 = dma.done [#allocation8], %s373
          %s375 = smul.u32 8, 1
          %s376 = smul.u32 %s375, 2
          %s377 = sshll.u32 %s376, 4
          %378 = dma.done %s360, %s377
          %v379 = vld [vmem:[#allocation4] sm:$0xff]
          %v380 = vld [vmem:[#allocation4 + $0x8] sm:$0xff]
          %v381 = vld [vmem:[#allocation2] sm:$0xff]
          %v382 = vld [vmem:[#allocation2 + $0x8] sm:$0xff]
          %v383 = vld [vmem:[#allocation2 + $0x10] sm:$0xff]
          %v384 = vld [vmem:[#allocation2 + $0x18] sm:$0xff]
          %v385 = vld [vmem:[#allocation2 + $0x20] sm:$0xff]
          %v386 = vld [vmem:[#allocation2 + $0x28] sm:$0xff]
          %v387 = vld [vmem:[#allocation2 + $0x30] sm:$0xff]
          %v388 = vld [vmem:[#allocation2 + $0x38] sm:$0xff]
          %v389 = vld [vmem:[#allocation2 + $0x40] sm:$0xff]
          %v390 = vld [vmem:[#allocation2 + $0x48] sm:$0xff]
          %v391 = vld [vmem:[#allocation2 + $0x50] sm:$0xff]
          %v392 = vld [vmem:[#allocation2 + $0x58] sm:$0xff]
          %v393 = vld [vmem:[#allocation2 + $0x60] sm:$0xff]
          %v394 = vld [vmem:[#allocation2 + $0x68] sm:$0xff]
          %v395 = vld [vmem:[#allocation2 + $0x70] sm:$0xff]
          %v396 = vld [vmem:[#allocation2 + $0x78] sm:$0xff]
          %v397 = vld [vmem:[#allocation2 + $0x80] sm:$0xff]
          %v398 = vld [vmem:[#allocation2 + $0x88] sm:$0xff]
          %v399 = vld [vmem:[#allocation2 + $0x90] sm:$0xff]
          %v400 = vld [vmem:[#allocation2 + $0x98] sm:$0xff]
          %v401 = vld [vmem:[#allocation2 + $0xa0] sm:$0xff]
          %v402 = vld [vmem:[#allocation2 + $0xa8] sm:$0xff]
          %v403 = vld [vmem:[#allocation2 + $0xb0] sm:$0xff]
          %v404 = vld [vmem:[#allocation2 + $0xb8] sm:$0xff]
          %v405 = vld [vmem:[#allocation2 + $0xc0] sm:$0xff]
          %v406 = vld [vmem:[#allocation2 + $0xc8] sm:$0xff]
          %v407 = vld [vmem:[#allocation2 + $0xd0] sm:$0xff]
          %v408 = vld [vmem:[#allocation2 + $0xd8] sm:$0xff]
          %v409 = vld [vmem:[#allocation2 + $0xe0] sm:$0xff]
          %v410 = vld [vmem:[#allocation2 + $0xe8] sm:$0xff]
          %v411 = vld [vmem:[#allocation2 + $0xf0] sm:$0xff]
          %v412 = vld [vmem:[#allocation2 + $0xf8] sm:$0xff]
          %413 = vmatprep.subr.mxu0 0.0
          %414 = vmatpush1.msra.mxu0 %v381
          %415 = vmatprep.subr.mxu0 0.0
          %416 = vmatpush1.msra.mxu0 %v382
          %417 = vmatprep.subr.mxu0 0.0
          %418 = vmatpush1.msra.mxu0 %v383
          %419 = vmatprep.subr.mxu0 0.0
          %420 = vmatpush1.msra.mxu0 %v384
          %421 = vmatprep.subr.mxu0 0.0
          %422 = vmatpush1.msra.mxu0 %v385
          %423 = vmatprep.subr.mxu0 0.0
          %424 = vmatpush1.msra.mxu0 %v386
          %425 = vmatprep.subr.mxu0 0.0
          %426 = vmatpush1.msra.mxu0 %v387
          %427 = vmatprep.subr.mxu0 0.0
          %428 = vmatpush1.msra.mxu0 %v388
          %429 = vmatprep.subr.mxu0 0.0
          %430 = vmatpush1.msra.mxu0 %v389
          %431 = vmatprep.subr.mxu0 0.0
          %432 = vmatpush1.msra.mxu0 %v390
          %433 = vmatprep.subr.mxu0 0.0
          %434 = vmatpush1.msra.mxu0 %v391
          %435 = vmatprep.subr.mxu0 0.0
          %436 = vmatpush1.msra.mxu0 %v392
          %437 = vmatprep.subr.mxu0 0.0
          %438 = vmatpush1.msra.mxu0 %v393
          %439 = vmatprep.subr.mxu0 0.0
          %440 = vmatpush1.msra.mxu0 %v394
          %441 = vmatprep.subr.mxu0 0.0
          %442 = vmatpush1.msra.mxu0 %v395
          %443 = vmatprep.subr.mxu0 0.0
          %444 = vmatpush1.msra.mxu0 %v396
          %445 = vmatprep.subr.mxu0 0.0
          %446 = vmatpush1.msra.mxu0 %v397
          %447 = vmatprep.subr.mxu0 0.0
          %448 = vmatpush1.msra.mxu0 %v398
          %449 = vmatprep.subr.mxu0 0.0
          %450 = vmatpush1.msra.mxu0 %v399
          %451 = vmatprep.subr.mxu0 0.0
          %452 = vmatpush1.msra.mxu0 %v400
          %453 = vmatprep.subr.mxu0 0.0
          %454 = vmatpush1.msra.mxu0 %v401
          %455 = vmatprep.subr.mxu0 0.0
          %456 = vmatpush1.msra.mxu0 %v402
          %457 = vmatprep.subr.mxu0 0.0
          %458 = vmatpush1.msra.mxu0 %v403
          %459 = vmatprep.subr.mxu0 0.0
          %460 = vmatpush1.msra.mxu0 %v404
          %461 = vmatprep.subr.mxu0 0.0
          %462 = vmatpush1.msra.mxu0 %v405
          %463 = vmatprep.subr.mxu0 0.0
          %464 = vmatpush1.msra.mxu0 %v406
          %465 = vmatprep.subr.mxu0 0.0
          %466 = vmatpush1.msra.mxu0 %v407
          %467 = vmatprep.subr.mxu0 0.0
          %468 = vmatpush1.msra.mxu0 %v408
          %469 = vmatprep.subr.mxu0 0.0
          %470 = vmatpush1.msra.mxu0 %v409
          %471 = vmatprep.subr.mxu0 0.0
          %472 = vmatpush1.msra.mxu0 %v410
          %473 = vmatprep.subr.mxu0 0.0
          %474 = vmatpush1.msra.mxu0 %v411
          %475 = vmatprep.subr.mxu0 0.0
          %476 = vmatpush1.msra.mxu0 %v412
          %477 = vmatprep.mubr.f32.mxu0 %v380
          %478 = vmatmul.mubr.f32.gmra.mrb[0].mxu0 %v379
          %v479 = vpop.f32.mrb[0].mxu0
          %v480 = vadd.f32 0.0, %v479
          %v481 = vpop.f32.mrb[0].mxu0
          %482 = vdwg.mxu0
          %483 = vst [vmem:[#allocation14] sm:$0xff] %v480
        $region52: #{tpu_custom_call.1} parent=39 // pred_fallthru
          _
        // Predicated region
        $region61: #{tpu_custom_call.1} parent=39 // pred_check
          _
        $region62: #{tpu_custom_call.1} parent=39 // pred_check_branch
          %485 = sbr.rel (%p342) target = $region64
        $region63: #{tpu_custom_call.1} parent=39 // pred_region
          %486 = vst [vmem:[#allocation6] sm:$0x1] 0.0
          %487 = vst [vmem:[#allocation7] sm:$0x1] 0.0
        $region64: #{tpu_custom_call.1} parent=39 // pred_fallthru
          _
        %s488 = smul.u32 %s32, 128
        // Predicated region
        $region65: #{tpu_custom_call.1} parent=39 // pred_check
          %p489 = pneg %p340
        $region66: #{tpu_custom_call.1} parent=39 // pred_check_branch
          %491 = sbr.rel (%p489) target = $region68
        $region67: #{tpu_custom_call.1} parent=39 // pred_region
          %s492 = scalar_lea.vmem [#allocation2], %s488
          %v493 = vld [vmem:[%s492] sm:$0xff]
          %v494 = vld [vmem:[%s492 + $0x8] sm:$0xff]
          %v495 = vld [vmem:[%s492 + $0x10] sm:$0xff]
          %v496 = vld [vmem:[%s492 + $0x18] sm:$0xff]
          %v497 = vld [vmem:[%s492 + $0x20] sm:$0xff]
          %v498 = vld [vmem:[%s492 + $0x28] sm:$0xff]
          %v499 = vld [vmem:[%s492 + $0x30] sm:$0xff]
          %v500 = vld [vmem:[%s492 + $0x38] sm:$0xff]
          %v501 = vld [vmem:[%s492 + $0x40] sm:$0xff]
          %v502 = vld [vmem:[%s492 + $0x48] sm:$0xff]
          %v503 = vld [vmem:[%s492 + $0x50] sm:$0xff]
          %v504 = vld [vmem:[%s492 + $0x58] sm:$0xff]
          %v505 = vld [vmem:[%s492 + $0x60] sm:$0xff]
          %v506 = vld [vmem:[%s492 + $0x68] sm:$0xff]
          %v507 = vld [vmem:[%s492 + $0x70] sm:$0xff]
          %v508 = vld [vmem:[%s492 + $0x78] sm:$0xff]
          %v509 = vld [vmem:[%s293] sm:$0xff]
          %v510 = vld [vmem:[%s293 + $0x8] sm:$0xff]
          %v511 = vld [vmem:[%s293 + $0x10] sm:$0xff]
          %v512 = vld [vmem:[%s293 + $0x18] sm:$0xff]
          %v513 = vld [vmem:[%s293 + $0x20] sm:$0xff]
          %v514 = vld [vmem:[%s293 + $0x28] sm:$0xff]
          %v515 = vld [vmem:[%s293 + $0x30] sm:$0xff]
          %v516 = vld [vmem:[%s293 + $0x38] sm:$0xff]
          %v517 = vld [vmem:[%s293 + $0x40] sm:$0xff]
          %v518 = vld [vmem:[%s293 + $0x48] sm:$0xff]
          %v519 = vld [vmem:[%s293 + $0x50] sm:$0xff]
          %v520 = vld [vmem:[%s293 + $0x58] sm:$0xff]
          %v521 = vld [vmem:[%s293 + $0x60] sm:$0xff]
          %v522 = vld [vmem:[%s293 + $0x68] sm:$0xff]
          %v523 = vld [vmem:[%s293 + $0x70] sm:$0xff]
          %v524 = vld [vmem:[%s293 + $0x78] sm:$0xff]
          %525 = vmatprep.subr.mxu0 0.0
          %526 = vmatpush1.msra.mxu0 %v509
          %527 = vmatprep.subr.mxu0 0.0
          %528 = vmatpush1.msra.mxu0 %v510
          %529 = vmatprep.subr.mxu0 0.0
          %530 = vmatpush1.msra.mxu0 %v511
          %531 = vmatprep.subr.mxu0 0.0
          %532 = vmatpush1.msra.mxu0 %v512
          %533 = vmatprep.subr.mxu0 0.0
          %534 = vmatpush1.msra.mxu0 %v513
          %535 = vmatprep.subr.mxu0 0.0
          %536 = vmatpush1.msra.mxu0 %v514
          %537 = vmatprep.subr.mxu0 0.0
          %538 = vmatpush1.msra.mxu0 %v515
          %539 = vmatprep.subr.mxu0 0.0
          %540 = vmatpush1.msra.mxu0 %v516
          %541 = vmatprep.subr.mxu0 0.0
          %542 = vmatpush1.msra.mxu0 %v517
          %543 = vmatprep.subr.mxu0 0.0
          %544 = vmatpush1.msra.mxu0 %v518
          %545 = vmatprep.subr.mxu0 0.0
          %546 = vmatpush1.msra.mxu0 %v519
          %547 = vmatprep.subr.mxu0 0.0
          %548 = vmatpush1.msra.mxu0 %v520
          %549 = vmatprep.subr.mxu0 0.0
          %550 = vmatpush1.msra.mxu0 %v521
          %551 = vmatprep.subr.mxu0 0.0
          %552 = vmatpush1.msra.mxu0 %v522
          %553 = vmatprep.subr.mxu0 0.0
          %554 = vmatpush1.msra.mxu0 %v523
          %555 = vmatprep.subr.mxu0 0.0
          %556 = vmatpush1.msra.mxu0 %v524
          %557 = vmatprep.subr.mxu0 0.0
          %558 = vmatpush1.msra.mxu0 0.0
          %559 = vmatprep.subr.mxu0 0.0
          %560 = vmatpush1.msra.mxu0 0.0
          %561 = vmatprep.subr.mxu0 0.0
          %562 = vmatpush1.msra.mxu0 0.0
          %563 = vmatprep.subr.mxu0 0.0
          %564 = vmatpush1.msra.mxu0 0.0
          %565 = vmatprep.subr.mxu0 0.0
          %566 = vmatpush1.msra.mxu0 0.0
          %567 = vmatprep.subr.mxu0 0.0
          %568 = vmatpush1.msra.mxu0 0.0
          %569 = vmatprep.subr.mxu0 0.0
          %570 = vmatpush1.msra.mxu0 0.0
          %571 = vmatprep.subr.mxu0 0.0
          %572 = vmatpush1.msra.mxu0 0.0
          %573 = vmatprep.subr.mxu0 0.0
          %574 = vmatpush1.msra.mxu0 0.0
          %575 = vmatprep.subr.mxu0 0.0
          %576 = vmatpush1.msra.mxu0 0.0
          %577 = vmatprep.subr.mxu0 0.0
          %578 = vmatpush1.msra.mxu0 0.0
          %579 = vmatprep.subr.mxu0 0.0
          %580 = vmatpush1.msra.mxu0 0.0
          %581 = vmatprep.subr.mxu0 0.0
          %582 = vmatpush1.msra.mxu0 0.0
          %583 = vmatprep.subr.mxu0 0.0
          %584 = vmatpush1.msra.mxu0 0.0
          %585 = vmatprep.subr.mxu0 0.0
          %586 = vmatpush1.msra.mxu0 0.0
          %587 = vmatprep.subr.mxu0 0.0
          %588 = vmatpush1.msra.mxu0 0.0
          %589 = vmatprep.mubr.f32.mxu0 0.0
          %590 = vmatmul.mubr.f32.gmra.mrb[0].mxu0 %v493
          %v591 = vpop.f32.mrb[0].mxu0
          %v592 = vadd.f32 0.0, %v591
          %v593 = vpop.f32.mrb[0].mxu0
          %594 = vmatprep.mubr.f32.mxu0 0.0
          %595 = vmatmul.mubr.f32.gmra.mrb[0].mxu0 %v494
          %v596 = vpop.f32.mrb[0].mxu0
          %v597 = vadd.f32 0.0, %v596
          %v598 = vpop.f32.mrb[0].mxu0
          %599 = vmatprep.mubr.f32.mxu0 0.0
          %600 = vmatmul.mubr.f32.gmra.mrb[0].mxu0 %v495
          %v601 = vpop.f32.mrb[0].mxu0
          %v602 = vadd.f32 0.0, %v601
          %v603 = vpop.f32.mrb[0].mxu0
          %604 = vmatprep.mubr.f32.mxu0 0.0
          %605 = vmatmul.mubr.f32.gmra.mrb[0].mxu0 %v496
          %v606 = vpop.f32.mrb[0].mxu0
          %v607 = vadd.f32 0.0, %v606
          %v608 = vpop.f32.mrb[0].mxu0
          %609 = vmatprep.mubr.f32.mxu0 0.0
          %610 = vmatmul.mubr.f32.gmra.mrb[0].mxu0 %v497
          %v611 = vpop.f32.mrb[0].mxu0
          %v612 = vadd.f32 0.0, %v611
          %v613 = vpop.f32.mrb[0].mxu0
          %614 = vmatprep.mubr.f32.mxu0 0.0
          %615 = vmatmul.mubr.f32.gmra.mrb[0].mxu0 %v498
          %v616 = vpop.f32.mrb[0].mxu0
          %v617 = vadd.f32 0.0, %v616
          %v618 = vpop.f32.mrb[0].mxu0
          %619 = vmatprep.mubr.f32.mxu0 0.0
          %620 = vmatmul.mubr.f32.gmra.mrb[0].mxu0 %v499
          %v621 = vpop.f32.mrb[0].mxu0
          %v622 = vadd.f32 0.0, %v621
          %v623 = vpop.f32.mrb[0].mxu0
          %624 = vmatprep.mubr.f32.mxu0 0.0
          %625 = vmatmul.mubr.f32.gmra.mrb[0].mxu0 %v500
          %v626 = vpop.f32.mrb[0].mxu0
          %v627 = vadd.f32 0.0, %v626
          %v628 = vpop.f32.mrb[0].mxu0
          %629 = vmatprep.mubr.f32.mxu0 0.0
          %630 = vmatmul.mubr.f32.gmra.mrb[0].mxu0 %v501
          %v631 = vpop.f32.mrb[0].mxu0
          %v632 = vadd.f32 0.0, %v631
          %v633 = vpop.f32.mrb[0].mxu0
          %634 = vmatprep.mubr.f32.mxu0 0.0
          %635 = vmatmul.mubr.f32.gmra.mrb[0].mxu0 %v502
          %v636 = vpop.f32.mrb[0].mxu0
          %v637 = vadd.f32 0.0, %v636
          %v638 = vpop.f32.mrb[0].mxu0
          %639 = vmatprep.mubr.f32.mxu0 0.0
          %640 = vmatmul.mubr.f32.gmra.mrb[0].mxu0 %v503
          %v641 = vpop.f32.mrb[0].mxu0
          %v642 = vadd.f32 0.0, %v641
          %v643 = vpop.f32.mrb[0].mxu0
          %644 = vmatprep.mubr.f32.mxu0 0.0
          %645 = vmatmul.mubr.f32.gmra.mrb[0].mxu0 %v504
          %v646 = vpop.f32.mrb[0].mxu0
          %v647 = vadd.f32 0.0, %v646
          %v648 = vpop.f32.mrb[0].mxu0
          %649 = vmatprep.mubr.f32.mxu0 0.0
          %650 = vmatmul.mubr.f32.gmra.mrb[0].mxu0 %v505
          %v651 = vpop.f32.mrb[0].mxu0
          %v652 = vadd.f32 0.0, %v651
          %v653 = vpop.f32.mrb[0].mxu0
          %654 = vmatprep.mubr.f32.mxu0 0.0
          %655 = vmatmul.mubr.f32.gmra.mrb[0].mxu0 %v506
          %v656 = vpop.f32.mrb[0].mxu0
          %v657 = vadd.f32 0.0, %v656
          %v658 = vpop.f32.mrb[0].mxu0
          %659 = vmatprep.mubr.f32.mxu0 0.0
          %660 = vmatmul.mubr.f32.gmra.mrb[0].mxu0 %v507
          %v661 = vpop.f32.mrb[0].mxu0
          %v662 = vadd.f32 0.0, %v661
          %v663 = vpop.f32.mrb[0].mxu0
          %664 = vmatprep.mubr.f32.mxu0 0.0
          %665 = vmatmul.mubr.f32.gmra.mrb[0].mxu0 %v508
          %v666 = vpop.f32.mrb[0].mxu0
          %v667 = vadd.f32 0.0, %v666
          %v668 = vpop.f32.mrb[0].mxu0
          %669 = vdwg.mxu0
          %v670 = vpack.c.bf16 %v597, %v592
          %v671 = vpack.c.bf16 %v607, %v602
          %v672 = vpack.c.bf16 %v617, %v612
          %v673 = vpack.c.bf16 %v627, %v622
          %v674 = vpack.c.bf16 %v637, %v632
          %v675 = vpack.c.bf16 %v647, %v642
          %v676 = vpack.c.bf16 %v657, %v652
          %v677 = vpack.c.bf16 %v667, %v662
          %s678 = sshra.s32 %s488, 4
          %s679 = sand.u32 %s488, 15
          %s680 = smul.addr %s678, 8
          %s681 = scalar_lea.vmem [#allocation3], %s680
          %682 = vst [vmem:[%s681] sm:$0xff] %v670
          %683 = vst [vmem:[%s681 + $0x8] sm:$0xff] %v671
          %684 = vst [vmem:[%s681 + $0x10] sm:$0xff] %v672
          %685 = vst [vmem:[%s681 + $0x18] sm:$0xff] %v673
          %686 = vst [vmem:[%s681 + $0x20] sm:$0xff] %v674
          %687 = vst [vmem:[%s681 + $0x28] sm:$0xff] %v675
          %688 = vst [vmem:[%s681 + $0x30] sm:$0xff] %v676
          %689 = vst [vmem:[%s681 + $0x38] sm:$0xff] %v677
        $region68: #{tpu_custom_call.1} parent=39 // pred_fallthru
          _
        // Predicated region
        $region69: #{tpu_custom_call.1} parent=39 // pred_check
          %p690 = pneg %p341
        $region70: #{tpu_custom_call.1} parent=39 // pred_check_branch
          %692 = sbr.rel (%p690) target = $region72
        $region71: #{tpu_custom_call.1} parent=39 // pred_region
          %693 = vst [vmem:[#allocation5] sm:$0xff] 0.0
          %694 = vst [vmem:[#allocation5 + $0x8] sm:$0xff] 0.0
          %695 = vst [vmem:[#allocation5 + $0x10] sm:$0xff] 0.0
          %696 = vst [vmem:[#allocation5 + $0x18] sm:$0xff] 0.0
          %697 = vst [vmem:[#allocation5 + $0x20] sm:$0xff] 0.0
          %698 = vst [vmem:[#allocation5 + $0x28] sm:$0xff] 0.0
          %699 = vst [vmem:[#allocation5 + $0x30] sm:$0xff] 0.0
          %700 = vst [vmem:[#allocation5 + $0x38] sm:$0xff] 0.0
          %701 = vst [vmem:[#allocation5 + $0x40] sm:$0xff] 0.0
          %702 = vst [vmem:[#allocation5 + $0x48] sm:$0xff] 0.0
          %703 = vst [vmem:[#allocation5 + $0x50] sm:$0xff] 0.0
          %704 = vst [vmem:[#allocation5 + $0x58] sm:$0xff] 0.0
          %705 = vst [vmem:[#allocation5 + $0x60] sm:$0xff] 0.0
          %706 = vst [vmem:[#allocation5 + $0x68] sm:$0xff] 0.0
          %707 = vst [vmem:[#allocation5 + $0x70] sm:$0xff] 0.0
          %708 = vst [vmem:[#allocation5 + $0x78] sm:$0xff] 0.0
        $region72: #{tpu_custom_call.1} parent=39 // pred_fallthru
          _
        %v709 = vld [vmem:[#allocation5] sm:$0xff]
        %v710 = vld [vmem:[#allocation5 + $0x8] sm:$0xff]
        %v711 = vld [vmem:[#allocation5 + $0x10] sm:$0xff]
        %v712 = vld [vmem:[#allocation5 + $0x18] sm:$0xff]
        %v713 = vld [vmem:[#allocation5 + $0x20] sm:$0xff]
        %v714 = vld [vmem:[#allocation5 + $0x28] sm:$0xff]
        %v715 = vld [vmem:[#allocation5 + $0x30] sm:$0xff]
        %v716 = vld [vmem:[#allocation5 + $0x38] sm:$0xff]
        %v717 = vld [vmem:[#allocation5 + $0x40] sm:$0xff]
        %v718 = vld [vmem:[#allocation5 + $0x48] sm:$0xff]
        %v719 = vld [vmem:[#allocation5 + $0x50] sm:$0xff]
        %v720 = vld [vmem:[#allocation5 + $0x58] sm:$0xff]
        %v721 = vld [vmem:[#allocation5 + $0x60] sm:$0xff]
        %v722 = vld [vmem:[#allocation5 + $0x68] sm:$0xff]
        %v723 = vld [vmem:[#allocation5 + $0x70] sm:$0xff]
        %v724 = vld [vmem:[#allocation5 + $0x78] sm:$0xff]
        %v725 = vld [vmem:[%s284] sm:$0xf]
        %v726 = vld [vmem:[%s284 + $0x4] sm:$0xf]
        %v727 = vld [vmem:[%s284 + $0x8] sm:$0xf]
        %v728 = vld [vmem:[%s284 + $0xc] sm:$0xf]
        %v729 = vld [vmem:[%s284 + $0x10] sm:$0xf]
        %v730 = vld [vmem:[%s284 + $0x14] sm:$0xf]
        %v731 = vld [vmem:[%s284 + $0x18] sm:$0xf]
        %v732 = vld [vmem:[%s284 + $0x1c] sm:$0xf]
        %v733 = vld [vmem:[%s284 + $0x20] sm:$0xf]
        %v734 = vld [vmem:[%s284 + $0x24] sm:$0xf]
        %v735 = vld [vmem:[%s284 + $0x28] sm:$0xf]
        %v736 = vld [vmem:[%s284 + $0x2c] sm:$0xf]
        %v737 = vld [vmem:[%s284 + $0x30] sm:$0xf]
        %v738 = vld [vmem:[%s284 + $0x34] sm:$0xf]
        %v739 = vld [vmem:[%s284 + $0x38] sm:$0xf]
        %v740 = vld [vmem:[%s284 + $0x3c] sm:$0xf]
        %s741 = sshra.s32 %s488, 4
        %s742 = sand.u32 %s488, 15
        %s743 = smul.addr %s741, 8
        %s744 = scalar_lea.vmem [#allocation3], %s743
        %v745 = vld [vmem:[%s744] sm:$0xff]
        %v746 = vld [vmem:[%s744 + $0x8] sm:$0xff]
        %v747 = vld [vmem:[%s744 + $0x10] sm:$0xff]
        %v748 = vld [vmem:[%s744 + $0x18] sm:$0xff]
        %v749 = vld [vmem:[%s744 + $0x20] sm:$0xff]
        %v750 = vld [vmem:[%s744 + $0x28] sm:$0xff]
        %v751 = vld [vmem:[%s744 + $0x30] sm:$0xff]
        %v752 = vld [vmem:[%s744 + $0x38] sm:$0xff]
        %v769 = vunpack.c.l.b16 %v725
        %v770 = vunpack.c.l.b16 %v726
        %v771 = vunpack.c.l.b16 %v727
        %v772 = vunpack.c.l.b16 %v728
        %v773 = vunpack.c.l.b16 %v729
        %v774 = vunpack.c.l.b16 %v730
        %v775 = vunpack.c.l.b16 %v731
        %v776 = vunpack.c.l.b16 %v732
        %v777 = vunpack.c.l.b16 %v733
        %v778 = vunpack.c.l.b16 %v734
        %v779 = vunpack.c.l.b16 %v735
        %v780 = vunpack.c.l.b16 %v736
        %v781 = vunpack.c.l.b16 %v737
        %v782 = vunpack.c.l.b16 %v738
        %v783 = vunpack.c.l.b16 %v739
        %v784 = vunpack.c.l.b16 %v740
        %v785 = vpack.c.b16 %v770, %v769
        %v786 = vpack.c.b16 %v772, %v771
        %v787 = vpack.c.b16 %v774, %v773
        %v788 = vpack.c.b16 %v776, %v775
        %v789 = vpack.c.b16 %v778, %v777
        %v790 = vpack.c.b16 %v780, %v779
        %v791 = vpack.c.b16 %v782, %v781
        %v792 = vpack.c.b16 %v784, %v783
        %801 = vmatprep.subr.bf16.mxu0 0
        %802 = vmatpush1.bf16.msra.mxu0 %v745
        %803 = vmatprep.subr.bf16.mxu0 0
        %804 = vmatpush1.bf16.msra.mxu0 %v746
        %805 = vmatprep.subr.bf16.mxu0 0
        %806 = vmatpush1.bf16.msra.mxu0 %v747
        %807 = vmatprep.subr.bf16.mxu0 0
        %808 = vmatpush1.bf16.msra.mxu0 %v748
        %809 = vmatprep.subr.bf16.mxu0 0
        %810 = vmatpush1.bf16.msra.mxu0 %v749
        %811 = vmatprep.subr.bf16.mxu0 0
        %812 = vmatpush1.bf16.msra.mxu0 %v750
        %813 = vmatprep.subr.bf16.mxu0 0
        %814 = vmatpush1.bf16.msra.mxu0 %v751
        %815 = vmatprep.subr.bf16.mxu0 0
        %816 = vmatpush1.bf16.msra.mxu0 %v752
        %817 = vmatprep.subr.bf16.mxu0 0
        %818 = vmatpush1.bf16.msra.mxu0 0
        %819 = vmatprep.subr.bf16.mxu0 0
        %820 = vmatpush1.bf16.msra.mxu0 0
        %821 = vmatprep.subr.bf16.mxu0 0
        %822 = vmatpush1.bf16.msra.mxu0 0
        %823 = vmatprep.subr.bf16.mxu0 0
        %824 = vmatpush1.bf16.msra.mxu0 0
        %825 = vmatprep.subr.bf16.mxu0 0
        %826 = vmatpush1.bf16.msra.mxu0 0
        %827 = vmatprep.subr.bf16.mxu0 0
        %828 = vmatpush1.bf16.msra.mxu0 0
        %829 = vmatprep.subr.bf16.mxu0 0
        %830 = vmatpush1.bf16.msra.mxu0 0
        %831 = vmatprep.subr.bf16.mxu0 0
        %832 = vmatpush1.bf16.msra.mxu0 0
        %833 = vmatprep.mubr.bf16.mxu0 0
        %834 = vmatmul.mubr.bf16.gmra.mrb[0].mxu0 %v785
        %v835 = vpop.f32.mrb[0].mxu0
        %v836 = vadd.f32 0.0, %v835
        %v837 = vpop.f32.mrb[0].mxu0
        %v838 = vpop.f32.mrb[0].mxu0
        %v839 = vadd.f32 0.0, %v838
        %v840 = vpop.f32.mrb[0].mxu0
        %841 = vmatprep.mubr.bf16.mxu0 0
        %842 = vmatmul.mubr.bf16.gmra.mrb[0].mxu0 %v786
        %v843 = vpop.f32.mrb[0].mxu0
        %v844 = vadd.f32 0.0, %v843
        %v845 = vpop.f32.mrb[0].mxu0
        %v846 = vpop.f32.mrb[0].mxu0
        %v847 = vadd.f32 0.0, %v846
        %v848 = vpop.f32.mrb[0].mxu0
        %849 = vmatprep.mubr.bf16.mxu0 0
        %850 = vmatmul.mubr.bf16.gmra.mrb[0].mxu0 %v787
        %v851 = vpop.f32.mrb[0].mxu0
        %v852 = vadd.f32 0.0, %v851
        %v853 = vpop.f32.mrb[0].mxu0
        %v854 = vpop.f32.mrb[0].mxu0
        %v855 = vadd.f32 0.0, %v854
        %v856 = vpop.f32.mrb[0].mxu0
        %857 = vmatprep.mubr.bf16.mxu0 0
        %858 = vmatmul.mubr.bf16.gmra.mrb[0].mxu0 %v788
        %v859 = vpop.f32.mrb[0].mxu0
        %v860 = vadd.f32 0.0, %v859
        %v861 = vpop.f32.mrb[0].mxu0
        %v862 = vpop.f32.mrb[0].mxu0
        %v863 = vadd.f32 0.0, %v862
        %v864 = vpop.f32.mrb[0].mxu0
        %865 = vmatprep.mubr.bf16.mxu0 0
        %866 = vmatmul.mubr.bf16.gmra.mrb[0].mxu0 %v789
        %v867 = vpop.f32.mrb[0].mxu0
        %v868 = vadd.f32 0.0, %v867
        %v869 = vpop.f32.mrb[0].mxu0
        %v870 = vpop.f32.mrb[0].mxu0
        %v871 = vadd.f32 0.0, %v870
        %v872 = vpop.f32.mrb[0].mxu0
        %873 = vmatprep.mubr.bf16.mxu0 0
        %874 = vmatmul.mubr.bf16.gmra.mrb[0].mxu0 %v790
        %v875 = vpop.f32.mrb[0].mxu0
        %v876 = vadd.f32 0.0, %v875
        %v877 = vpop.f32.mrb[0].mxu0
        %v878 = vpop.f32.mrb[0].mxu0
        %v879 = vadd.f32 0.0, %v878
        %v880 = vpop.f32.mrb[0].mxu0
        %881 = vmatprep.mubr.bf16.mxu0 0
        %882 = vmatmul.mubr.bf16.gmra.mrb[0].mxu0 %v791
        %v883 = vpop.f32.mrb[0].mxu0
        %v884 = vadd.f32 0.0, %v883
        %v885 = vpop.f32.mrb[0].mxu0
        %v886 = vpop.f32.mrb[0].mxu0
        %v887 = vadd.f32 0.0, %v886
        %v888 = vpop.f32.mrb[0].mxu0
        %889 = vmatprep.mubr.bf16.mxu0 0
        %890 = vmatmul.mubr.bf16.gmra.mrb[0].mxu0 %v792
        %v891 = vpop.f32.mrb[0].mxu0
        %v892 = vadd.f32 0.0, %v891
        %v893 = vpop.f32.mrb[0].mxu0
        %v894 = vpop.f32.mrb[0].mxu0
        %v895 = vadd.f32 0.0, %v894
        %v896 = vpop.f32.mrb[0].mxu0
        %897 = vdwg.mxu0
        %v898 = vadd.f32 %v709, %v836
        %v899 = vadd.f32 %v710, %v839
        %v900 = vadd.f32 %v711, %v844
        %v901 = vadd.f32 %v712, %v847
        %v902 = vadd.f32 %v713, %v852
        %v903 = vadd.f32 %v714, %v855
        %v904 = vadd.f32 %v715, %v860
        %v905 = vadd.f32 %v716, %v863
        %v906 = vadd.f32 %v717, %v868
        %v907 = vadd.f32 %v718, %v871
        %v908 = vadd.f32 %v719, %v876
        %v909 = vadd.f32 %v720, %v879
        %v910 = vadd.f32 %v721, %v884
        %v911 = vadd.f32 %v722, %v887
        %v912 = vadd.f32 %v723, %v892
        %v913 = vadd.f32 %v724, %v895
        %914 = vst [vmem:[#allocation5] sm:$0xff] %v898
        %915 = vst [vmem:[#allocation5 + $0x8] sm:$0xff] %v899
        %916 = vst [vmem:[#allocation5 + $0x10] sm:$0xff] %v900
        %917 = vst [vmem:[#allocation5 + $0x18] sm:$0xff] %v901
        %918 = vst [vmem:[#allocation5 + $0x20] sm:$0xff] %v902
        %919 = vst [vmem:[#allocation5 + $0x28] sm:$0xff] %v903
        %920 = vst [vmem:[#allocation5 + $0x30] sm:$0xff] %v904
        %921 = vst [vmem:[#allocation5 + $0x38] sm:$0xff] %v905
        %922 = vst [vmem:[#allocation5 + $0x40] sm:$0xff] %v906
        %923 = vst [vmem:[#allocation5 + $0x48] sm:$0xff] %v907
        %924 = vst [vmem:[#allocation5 + $0x50] sm:$0xff] %v908
        %925 = vst [vmem:[#allocation5 + $0x58] sm:$0xff] %v909
        %926 = vst [vmem:[#allocation5 + $0x60] sm:$0xff] %v910
        %927 = vst [vmem:[#allocation5 + $0x68] sm:$0xff] %v911
        %928 = vst [vmem:[#allocation5 + $0x70] sm:$0xff] %v912
        %929 = vst [vmem:[#allocation5 + $0x78] sm:$0xff] %v913
        %p930 = scmp.eq.s32.totalorder %s32, 1
        // Predicated region
        $region73: #{tpu_custom_call.1} parent=39 // pred_check
          %p931 = pneg %p930
        $region74: #{tpu_custom_call.1} parent=39 // pred_check_branch
          %933 = sbr.rel (%p931) target = $region76
        $region75: #{tpu_custom_call.1} parent=39 // pred_region
          %v934 = vld [vmem:[#allocation5] sm:$0xff]
          %v935 = vld [vmem:[#allocation5 + $0x8] sm:$0xff]
          %v936 = vld [vmem:[#allocation5 + $0x10] sm:$0xff]
          %v937 = vld [vmem:[#allocation5 + $0x18] sm:$0xff]
          %v938 = vld [vmem:[#allocation5 + $0x20] sm:$0xff]
          %v939 = vld [vmem:[#allocation5 + $0x28] sm:$0xff]
          %v940 = vld [vmem:[#allocation5 + $0x30] sm:$0xff]
          %v941 = vld [vmem:[#allocation5 + $0x38] sm:$0xff]
          %v942 = vld [vmem:[#allocation5 + $0x40] sm:$0xff]
          %v943 = vld [vmem:[#allocation5 + $0x48] sm:$0xff]
          %v944 = vld [vmem:[#allocation5 + $0x50] sm:$0xff]
          %v945 = vld [vmem:[#allocation5 + $0x58] sm:$0xff]
          %v946 = vld [vmem:[#allocation5 + $0x60] sm:$0xff]
          %v947 = vld [vmem:[#allocation5 + $0x68] sm:$0xff]
          %v948 = vld [vmem:[#allocation5 + $0x70] sm:$0xff]
          %v949 = vld [vmem:[#allocation5 + $0x78] sm:$0xff]
          %v950 = vld [vmem:[%s332] sm:$0x1]
          %v952 = vlaneseq
          %v953 = vshrl.u32 %v952, 7
          %v954 = vsub.s32 0, %v953
          %v955 = vrot.slane %v950, %v954
          %v957 = vadd.f32 %v934, %v955
          %v958 = vadd.f32 %v935, %v955
          %v959 = vadd.f32 %v936, %v955
          %v960 = vadd.f32 %v937, %v955
          %v961 = vadd.f32 %v938, %v955
          %v962 = vadd.f32 %v939, %v955
          %v963 = vadd.f32 %v940, %v955
          %v964 = vadd.f32 %v941, %v955
          %v965 = vadd.f32 %v942, %v955
          %v966 = vadd.f32 %v943, %v955
          %v967 = vadd.f32 %v944, %v955
          %v968 = vadd.f32 %v945, %v955
          %v969 = vadd.f32 %v946, %v955
          %v970 = vadd.f32 %v947, %v955
          %v971 = vadd.f32 %v948, %v955
          %v972 = vadd.f32 %v949, %v955
          %s973 = smul.u32 %s31, 128
          %s974 = scalar_lea.vmem [#allocation2], %s973
          %975 = vst [vmem:[%s974] sm:$0xff] %v957
          %976 = vst [vmem:[%s974 + $0x8] sm:$0xff] %v958
          %977 = vst [vmem:[%s974 + $0x10] sm:$0xff] %v959
          %978 = vst [vmem:[%s974 + $0x18] sm:$0xff] %v960
          %979 = vst [vmem:[%s974 + $0x20] sm:$0xff] %v961
          %980 = vst [vmem:[%s974 + $0x28] sm:$0xff] %v962
          %981 = vst [vmem:[%s974 + $0x30] sm:$0xff] %v963
          %982 = vst [vmem:[%s974 + $0x38] sm:$0xff] %v964
          %983 = vst [vmem:[%s974 + $0x40] sm:$0xff] %v965
          %984 = vst [vmem:[%s974 + $0x48] sm:$0xff] %v966
          %985 = vst [vmem:[%s974 + $0x50] sm:$0xff] %v967
          %986 = vst [vmem:[%s974 + $0x58] sm:$0xff] %v968
          %987 = vst [vmem:[%s974 + $0x60] sm:$0xff] %v969
          %988 = vst [vmem:[%s974 + $0x68] sm:$0xff] %v970
          %989 = vst [vmem:[%s974 + $0x70] sm:$0xff] %v971
          %990 = vst [vmem:[%s974 + $0x78] sm:$0xff] %v972
          %v991 = vlaneseq
          %v992 = vshrl.u32 %v991, 7
          %v993 = vadd.s32 %v992, 8
          %v994 = vadd.s32 %v992, 16
          %v995 = vadd.s32 %v992, 24
          %v996 = vadd.s32 %v992, 32
          %v997 = vadd.s32 %v992, 40
          %v998 = vadd.s32 %v992, 48
          %v999 = vadd.s32 %v992, 56
          %v1000 = vadd.s32 %v992, 64
          %v1001 = vadd.s32 %v992, 72
          %v1002 = vadd.s32 %v992, 80
          %v1003 = vadd.s32 %v992, 88
          %v1004 = vadd.s32 %v992, 96
          %v1005 = vadd.s32 %v992, 104
          %v1006 = vadd.s32 %v992, 112
          %v1007 = vadd.s32 %v992, 120
          %v1008 = vstv %s973
          %v1009 = vadd.s32 %v1008, %v992
          %v1010 = vadd.s32 %v1008, %v993
          %v1011 = vadd.s32 %v1008, %v994
          %v1012 = vadd.s32 %v1008, %v995
          %v1013 = vadd.s32 %v1008, %v996
          %v1014 = vadd.s32 %v1008, %v997
          %v1015 = vadd.s32 %v1008, %v998
          %v1016 = vadd.s32 %v1008, %v999
          %v1017 = vadd.s32 %v1008, %v1000
          %v1018 = vadd.s32 %v1008, %v1001
          %v1019 = vadd.s32 %v1008, %v1002
          %v1020 = vadd.s32 %v1008, %v1003
          %v1021 = vadd.s32 %v1008, %v1004
          %v1022 = vadd.s32 %v1008, %v1005
          %v1023 = vadd.s32 %v1008, %v1006
          %v1024 = vadd.s32 %v1008, %v1007
          %vm1025 = vcmp.lt.s32.totalorder %v1009, 200
          %vm1026 = vcmp.lt.s32.totalorder %v1010, 200
          %vm1027 = vcmp.lt.s32.totalorder %v1011, 200
          %vm1028 = vcmp.lt.s32.totalorder %v1012, 200
          %vm1029 = vcmp.lt.s32.totalorder %v1013, 200
          %vm1030 = vcmp.lt.s32.totalorder %v1014, 200
          %vm1031 = vcmp.lt.s32.totalorder %v1015, 200
          %vm1032 = vcmp.lt.s32.totalorder %v1016, 200
          %vm1033 = vcmp.lt.s32.totalorder %v1017, 200
          %vm1034 = vcmp.lt.s32.totalorder %v1018, 200
          %vm1035 = vcmp.lt.s32.totalorder %v1019, 200
          %vm1036 = vcmp.lt.s32.totalorder %v1020, 200
          %vm1037 = vcmp.lt.s32.totalorder %v1021, 200
          %vm1038 = vcmp.lt.s32.totalorder %v1022, 200
          %vm1039 = vcmp.lt.s32.totalorder %v1023, 200
          %vm1040 = vcmp.lt.s32.totalorder %v1024, 200
          %v1041 = vsel %vm1025, 1, 0
          %v1042 = vsel %vm1026, 1, 0
          %v1043 = vsel %vm1027, 1, 0
          %v1044 = vsel %vm1028, 1, 0
          %v1045 = vsel %vm1029, 1, 0
          %v1046 = vsel %vm1030, 1, 0
          %v1047 = vsel %vm1031, 1, 0
          %v1048 = vsel %vm1032, 1, 0
          %v1049 = vsel %vm1033, 1, 0
          %v1050 = vsel %vm1034, 1, 0
          %v1051 = vsel %vm1035, 1, 0
          %v1052 = vsel %vm1036, 1, 0
          %v1053 = vsel %vm1037, 1, 0
          %v1054 = vsel %vm1038, 1, 0
          %v1055 = vsel %vm1039, 1, 0
          %v1056 = vsel %vm1040, 1, 0
          %v1057 = vcvt.s32.f32 %v1041
          %v1058 = vcvt.s32.f32 %v1042
          %v1059 = vcvt.s32.f32 %v1043
          %v1060 = vcvt.s32.f32 %v1044
          %v1061 = vcvt.s32.f32 %v1045
          %v1062 = vcvt.s32.f32 %v1046
          %v1063 = vcvt.s32.f32 %v1047
          %v1064 = vcvt.s32.f32 %v1048
          %v1065 = vcvt.s32.f32 %v1049
          %v1066 = vcvt.s32.f32 %v1050
          %v1067 = vcvt.s32.f32 %v1051
          %v1068 = vcvt.s32.f32 %v1052
          %v1069 = vcvt.s32.f32 %v1053
          %v1070 = vcvt.s32.f32 %v1054
          %v1071 = vcvt.s32.f32 %v1055
          %v1072 = vcvt.s32.f32 %v1056
          %v1073 = vmul.f32 %v957, %v1057
          %v1074 = vmul.f32 %v958, %v1058
          %v1075 = vmul.f32 %v959, %v1059
          %v1076 = vmul.f32 %v960, %v1060
          %v1077 = vmul.f32 %v961, %v1061
          %v1078 = vmul.f32 %v962, %v1062
          %v1079 = vmul.f32 %v963, %v1063
          %v1080 = vmul.f32 %v964, %v1064
          %v1081 = vmul.f32 %v965, %v1065
          %v1082 = vmul.f32 %v966, %v1066
          %v1083 = vmul.f32 %v967, %v1067
          %v1084 = vmul.f32 %v968, %v1068
          %v1085 = vmul.f32 %v969, %v1069
          %v1086 = vmul.f32 %v970, %v1070
          %v1087 = vmul.f32 %v971, %v1071
          %v1088 = vmul.f32 %v972, %v1072
          %v1089 = vld [vmem:[#allocation6] sm:$0x1]
          %v1090 = vadd.f32 %v1073, %v1074
          %v1091 = vadd.f32 %v1090, %v1075
          %v1092 = vadd.f32 %v1091, %v1076
          %v1093 = vadd.f32 %v1092, %v1077
          %v1094 = vadd.f32 %v1093, %v1078
          %v1095 = vadd.f32 %v1094, %v1079
          %v1096 = vadd.f32 %v1095, %v1080
          %v1097 = vadd.f32 %v1096, %v1081
          %v1098 = vadd.f32 %v1097, %v1082
          %v1099 = vadd.f32 %v1098, %v1083
          %v1100 = vadd.f32 %v1099, %v1084
          %v1101 = vadd.f32 %v1100, %v1085
          %v1102 = vadd.f32 %v1101, %v1086
          %v1103 = vadd.f32 %v1102, %v1087
          %v1104 = vadd.f32 %v1103, %v1088
          %v1105 = vrot.slane %v1104, 4
          %v1106 = vadd.f32 %v1104, %v1105
          %v1107 = vrot.slane %v1106, 2
          %v1108 = vadd.f32 %v1106, %v1107
          %v1109 = vrot.slane %v1108, 1
          %v1110 = vadd.f32 %v1108, %v1109
          %v1111 = vadd.f32 %v1089, %v1110
          %1112 = vst [vmem:[#allocation6] sm:$0x1] %v1111
          %v1113 = vld [vmem:[#allocation7] sm:$0x1]
          %v1114 = vmul.f32 %v1073, %v1073
          %v1115 = vmul.f32 %v1074, %v1074
          %v1116 = vmul.f32 %v1075, %v1075
          %v1117 = vmul.f32 %v1076, %v1076
          %v1118 = vmul.f32 %v1077, %v1077
          %v1119 = vmul.f32 %v1078, %v1078
          %v1120 = vmul.f32 %v1079, %v1079
          %v1121 = vmul.f32 %v1080, %v1080
          %v1122 = vmul.f32 %v1081, %v1081
          %v1123 = vmul.f32 %v1082, %v1082
          %v1124 = vmul.f32 %v1083, %v1083
          %v1125 = vmul.f32 %v1084, %v1084
          %v1126 = vmul.f32 %v1085, %v1085
          %v1127 = vmul.f32 %v1086, %v1086
          %v1128 = vmul.f32 %v1087, %v1087
          %v1129 = vmul.f32 %v1088, %v1088
          %v1130 = vadd.f32 %v1114, %v1115
          %v1131 = vadd.f32 %v1130, %v1116
          %v1132 = vadd.f32 %v1131, %v1117
          %v1133 = vadd.f32 %v1132, %v1118
          %v1134 = vadd.f32 %v1133, %v1119
          %v1135 = vadd.f32 %v1134, %v1120
          %v1136 = vadd.f32 %v1135, %v1121
          %v1137 = vadd.f32 %v1136, %v1122
          %v1138 = vadd.f32 %v1137, %v1123
          %v1139 = vadd.f32 %v1138, %v1124
          %v1140 = vadd.f32 %v1139, %v1125
          %v1141 = vadd.f32 %v1140, %v1126
          %v1142 = vadd.f32 %v1141, %v1127
          %v1143 = vadd.f32 %v1142, %v1128
          %v1144 = vadd.f32 %v1143, %v1129
          %v1145 = vrot.slane %v1144, 4
          %v1146 = vadd.f32 %v1144, %v1145
          %v1147 = vrot.slane %v1146, 2
          %v1148 = vadd.f32 %v1146, %v1147
          %v1149 = vrot.slane %v1148, 1
          %v1150 = vadd.f32 %v1148, %v1149
          %v1151 = vadd.f32 %v1113, %v1150
          %1152 = vst [vmem:[#allocation7] sm:$0x1] %v1151
        $region76: #{tpu_custom_call.1} parent=39 // pred_fallthru
          _
        %p1153 = scmp.eq.s32.totalorder %s31, 1
        %p1154 = pnand %p1153, %p930
        %p1155 = pneg %p1154
        // Predicated region
        $region77: #{tpu_custom_call.1} parent=39 // pred_check
          _
        $region78: #{tpu_custom_call.1} parent=39 // pred_check_branch
          %1157 = sbr.rel (%p1154) target = $region80
        $region79: #{tpu_custom_call.1} parent=39 // pred_region
          %v1158 = vld [vmem:[#allocation6] sm:$0x1]
          %v1159 = vmul.f32 %v1158, 0.005
          %v1160 = vld [vmem:[#allocation7] sm:$0x1]
          %v1161 = vmul.f32 %v1160, 0.005
          %v1162 = vmul.f32 %v1159, %v1159
          %v1163 = vsub.f32 %v1161, %v1162
          %v1164 = vmax.f32 %v1163, 0.0
          %v1165 = vld [vmem:[%s335] sm:$0x1]
          %v1166 = vadd.f32 %v1164, 1e-05
          %v1167 = vrsqrt.pop %v1166
          %v1168 = vmul.f32 %v1165, %v1167
          %v1169 = vld [vmem:[%s338] sm:$0x1]
          %v1170 = vmul.f32 %v1159, %v1168
          %v1171 = vsub.f32 %v1169, %v1170
          %v1172 = vlaneseq
          %v1173 = vshrl.u32 %v1172, 7
          %v1174 = vadd.s32 %v1173, 8
          %v1175 = vadd.s32 %v1173, 16
          %v1176 = vadd.s32 %v1173, 24
          %v1177 = vadd.s32 %v1173, 32
          %v1178 = vadd.s32 %v1173, 40
          %v1179 = vadd.s32 %v1173, 48
          %v1180 = vadd.s32 %v1173, 56
          %v1181 = vadd.s32 %v1173, 64
          %v1182 = vadd.s32 %v1173, 72
          %v1183 = vadd.s32 %v1173, 80
          %v1184 = vadd.s32 %v1173, 88
          %v1185 = vadd.s32 %v1173, 96
          %v1186 = vadd.s32 %v1173, 104
          %v1187 = vadd.s32 %v1173, 112
          %v1188 = vadd.s32 %v1173, 120
          %v1189 = vadd.s32 %v1173, 128
          %v1190 = vadd.s32 %v1173, 136
          %v1191 = vadd.s32 %v1173, 144
          %v1192 = vadd.s32 %v1173, 152
          %v1193 = vadd.s32 %v1173, 160
          %v1194 = vadd.s32 %v1173, 168
          %v1195 = vadd.s32 %v1173, 176
          %v1196 = vadd.s32 %v1173, 184
          %v1197 = vadd.s32 %v1173, 192
          %v1198 = vadd.s32 %v1173, 200
          %v1199 = vadd.s32 %v1173, 208
          %v1200 = vadd.s32 %v1173, 216
          %v1201 = vadd.s32 %v1173, 224
          %v1202 = vadd.s32 %v1173, 232
          %v1203 = vadd.s32 %v1173, 240
          %v1204 = vadd.s32 %v1173, 248
          %vm1205 = vcmp.lt.s32.totalorder %v1173, 200
          %vm1206 = vcmp.lt.s32.totalorder %v1174, 200
          %vm1207 = vcmp.lt.s32.totalorder %v1175, 200
          %vm1208 = vcmp.lt.s32.totalorder %v1176, 200
          %vm1209 = vcmp.lt.s32.totalorder %v1177, 200
          %vm1210 = vcmp.lt.s32.totalorder %v1178, 200
          %vm1211 = vcmp.lt.s32.totalorder %v1179, 200
          %vm1212 = vcmp.lt.s32.totalorder %v1180, 200
          %vm1213 = vcmp.lt.s32.totalorder %v1181, 200
          %vm1214 = vcmp.lt.s32.totalorder %v1182, 200
          %vm1215 = vcmp.lt.s32.totalorder %v1183, 200
          %vm1216 = vcmp.lt.s32.totalorder %v1184, 200
          %vm1217 = vcmp.lt.s32.totalorder %v1185, 200
          %vm1218 = vcmp.lt.s32.totalorder %v1186, 200
          %vm1219 = vcmp.lt.s32.totalorder %v1187, 200
          %vm1220 = vcmp.lt.s32.totalorder %v1188, 200
          %vm1221 = vcmp.lt.s32.totalorder %v1189, 200
          %vm1222 = vcmp.lt.s32.totalorder %v1190, 200
          %vm1223 = vcmp.lt.s32.totalorder %v1191, 200
          %vm1224 = vcmp.lt.s32.totalorder %v1192, 200
          %vm1225 = vcmp.lt.s32.totalorder %v1193, 200
          %vm1226 = vcmp.lt.s32.totalorder %v1194, 200
          %vm1227 = vcmp.lt.s32.totalorder %v1195, 200
          %vm1228 = vcmp.lt.s32.totalorder %v1196, 200
          %vm1229 = vcmp.lt.s32.totalorder %v1197, 200
          %vm1230 = vcmp.lt.s32.totalorder %v1198, 200
          %vm1231 = vcmp.lt.s32.totalorder %v1199, 200
          %vm1232 = vcmp.lt.s32.totalorder %v1200, 200
          %vm1233 = vcmp.lt.s32.totalorder %v1201, 200
          %vm1234 = vcmp.lt.s32.totalorder %v1202, 200
          %vm1235 = vcmp.lt.s32.totalorder %v1203, 200
          %vm1236 = vcmp.lt.s32.totalorder %v1204, 200
          %v1237 = vsel %vm1205, 1, 0
          %v1238 = vsel %vm1206, 1, 0
          %v1239 = vsel %vm1207, 1, 0
          %v1240 = vsel %vm1208, 1, 0
          %v1241 = vsel %vm1209, 1, 0
          %v1242 = vsel %vm1210, 1, 0
          %v1243 = vsel %vm1211, 1, 0
          %v1244 = vsel %vm1212, 1, 0
          %v1245 = vsel %vm1213, 1, 0
          %v1246 = vsel %vm1214, 1, 0
          %v1247 = vsel %vm1215, 1, 0
          %v1248 = vsel %vm1216, 1, 0
          %v1249 = vsel %vm1217, 1, 0
          %v1250 = vsel %vm1218, 1, 0
          %v1251 = vsel %vm1219, 1, 0
          %v1252 = vsel %vm1220, 1, 0
          %v1253 = vsel %vm1221, 1, 0
          %v1254 = vsel %vm1222, 1, 0
          %v1255 = vsel %vm1223, 1, 0
          %v1256 = vsel %vm1224, 1, 0
          %v1257 = vsel %vm1225, 1, 0
          %v1258 = vsel %vm1226, 1, 0
          %v1259 = vsel %vm1227, 1, 0
          %v1260 = vsel %vm1228, 1, 0
          %v1261 = vsel %vm1229, 1, 0
          %v1262 = vsel %vm1230, 1, 0
          %v1263 = vsel %vm1231, 1, 0
          %v1264 = vsel %vm1232, 1, 0
          %v1265 = vsel %vm1233, 1, 0
          %v1266 = vsel %vm1234, 1, 0
          %v1267 = vsel %vm1235, 1, 0
          %v1268 = vsel %vm1236, 1, 0
          %v1269 = vcvt.s32.f32 %v1237
          %v1270 = vcvt.s32.f32 %v1238
          %v1271 = vcvt.s32.f32 %v1239
          %v1272 = vcvt.s32.f32 %v1240
          %v1273 = vcvt.s32.f32 %v1241
          %v1274 = vcvt.s32.f32 %v1242
          %v1275 = vcvt.s32.f32 %v1243
          %v1276 = vcvt.s32.f32 %v1244
          %v1277 = vcvt.s32.f32 %v1245
          %v1278 = vcvt.s32.f32 %v1246
          %v1279 = vcvt.s32.f32 %v1247
          %v1280 = vcvt.s32.f32 %v1248
          %v1281 = vcvt.s32.f32 %v1249
          %v1282 = vcvt.s32.f32 %v1250
          %v1283 = vcvt.s32.f32 %v1251
          %v1284 = vcvt.s32.f32 %v1252
          %v1285 = vcvt.s32.f32 %v1253
          %v1286 = vcvt.s32.f32 %v1254
          %v1287 = vcvt.s32.f32 %v1255
          %v1288 = vcvt.s32.f32 %v1256
          %v1289 = vcvt.s32.f32 %v1257
          %v1290 = vcvt.s32.f32 %v1258
          %v1291 = vcvt.s32.f32 %v1259
          %v1292 = vcvt.s32.f32 %v1260
          %v1293 = vcvt.s32.f32 %v1261
          %v1294 = vcvt.s32.f32 %v1262
          %v1295 = vcvt.s32.f32 %v1263
          %v1296 = vcvt.s32.f32 %v1264
          %v1297 = vcvt.s32.f32 %v1265
          %v1298 = vcvt.s32.f32 %v1266
          %v1299 = vcvt.s32.f32 %v1267
          %v1300 = vcvt.s32.f32 %v1268
          %v1301 = vld [vmem:[#allocation2] sm:$0xff]
          %v1302 = vld [vmem:[#allocation2 + $0x8] sm:$0xff]
          %v1303 = vld [vmem:[#allocation2 + $0x10] sm:$0xff]
          %v1304 = vld [vmem:[#allocation2 + $0x18] sm:$0xff]
          %v1305 = vld [vmem:[#allocation2 + $0x20] sm:$0xff]
          %v1306 = vld [vmem:[#allocation2 + $0x28] sm:$0xff]
          %v1307 = vld [vmem:[#allocation2 + $0x30] sm:$0xff]
          %v1308 = vld [vmem:[#allocation2 + $0x38] sm:$0xff]
          %v1309 = vld [vmem:[#allocation2 + $0x40] sm:$0xff]
          %v1310 = vld [vmem:[#allocation2 + $0x48] sm:$0xff]
          %v1311 = vld [vmem:[#allocation2 + $0x50] sm:$0xff]
          %v1312 = vld [vmem:[#allocation2 + $0x58] sm:$0xff]
          %v1313 = vld [vmem:[#allocation2 + $0x60] sm:$0xff]
          %v1314 = vld [vmem:[#allocation2 + $0x68] sm:$0xff]
          %v1315 = vld [vmem:[#allocation2 + $0x70] sm:$0xff]
          %v1316 = vld [vmem:[#allocation2 + $0x78] sm:$0xff]
          %v1317 = vld [vmem:[#allocation2 + $0x80] sm:$0xff]
          %v1318 = vld [vmem:[#allocation2 + $0x88] sm:$0xff]
          %v1319 = vld [vmem:[#allocation2 + $0x90] sm:$0xff]
          %v1320 = vld [vmem:[#allocation2 + $0x98] sm:$0xff]
          %v1321 = vld [vmem:[#allocation2 + $0xa0] sm:$0xff]
          %v1322 = vld [vmem:[#allocation2 + $0xa8] sm:$0xff]
          %v1323 = vld [vmem:[#allocation2 + $0xb0] sm:$0xff]
          %v1324 = vld [vmem:[#allocation2 + $0xb8] sm:$0xff]
          %v1325 = vld [vmem:[#allocation2 + $0xc0] sm:$0xff]
          %v1326 = vld [vmem:[#allocation2 + $0xc8] sm:$0xff]
          %v1327 = vld [vmem:[#allocation2 + $0xd0] sm:$0xff]
          %v1328 = vld [vmem:[#allocation2 + $0xd8] sm:$0xff]
          %v1329 = vld [vmem:[#allocation2 + $0xe0] sm:$0xff]
          %v1330 = vld [vmem:[#allocation2 + $0xe8] sm:$0xff]
          %v1331 = vld [vmem:[#allocation2 + $0xf0] sm:$0xff]
          %v1332 = vld [vmem:[#allocation2 + $0xf8] sm:$0xff]
          %v1334 = vlaneseq
          %v1335 = vshrl.u32 %v1334, 7
          %v1336 = vsub.s32 0, %v1335
          %v1337 = vrot.slane %v1168, %v1336
          %v1339 = vmul.f32 %v1301, %v1337
          %v1340 = vmul.f32 %v1302, %v1337
          %v1341 = vmul.f32 %v1303, %v1337
          %v1342 = vmul.f32 %v1304, %v1337
          %v1343 = vmul.f32 %v1305, %v1337
          %v1344 = vmul.f32 %v1306, %v1337
          %v1345 = vmul.f32 %v1307, %v1337
          %v1346 = vmul.f32 %v1308, %v1337
          %v1347 = vmul.f32 %v1309, %v1337
          %v1348 = vmul.f32 %v1310, %v1337
          %v1349 = vmul.f32 %v1311, %v1337
          %v1350 = vmul.f32 %v1312, %v1337
          %v1351 = vmul.f32 %v1313, %v1337
          %v1352 = vmul.f32 %v1314, %v1337
          %v1353 = vmul.f32 %v1315, %v1337
          %v1354 = vmul.f32 %v1316, %v1337
          %v1355 = vmul.f32 %v1317, %v1337
          %v1356 = vmul.f32 %v1318, %v1337
          %v1357 = vmul.f32 %v1319, %v1337
          %v1358 = vmul.f32 %v1320, %v1337
          %v1359 = vmul.f32 %v1321, %v1337
          %v1360 = vmul.f32 %v1322, %v1337
          %v1361 = vmul.f32 %v1323, %v1337
          %v1362 = vmul.f32 %v1324, %v1337
          %v1363 = vmul.f32 %v1325, %v1337
          %v1364 = vmul.f32 %v1326, %v1337
          %v1365 = vmul.f32 %v1327, %v1337
          %v1366 = vmul.f32 %v1328, %v1337
          %v1367 = vmul.f32 %v1329, %v1337
          %v1368 = vmul.f32 %v1330, %v1337
          %v1369 = vmul.f32 %v1331, %v1337
          %v1370 = vmul.f32 %v1332, %v1337
          %v1372 = vlaneseq
          %v1373 = vshrl.u32 %v1372, 7
          %v1374 = vsub.s32 0, %v1373
          %v1375 = vrot.slane %v1171, %v1374
          %v1377 = vadd.f32 %v1339, %v1375
          %v1378 = vadd.f32 %v1340, %v1375
          %v1379 = vadd.f32 %v1341, %v1375
          %v1380 = vadd.f32 %v1342, %v1375
          %v1381 = vadd.f32 %v1343, %v1375
          %v1382 = vadd.f32 %v1344, %v1375
          %v1383 = vadd.f32 %v1345, %v1375
          %v1384 = vadd.f32 %v1346, %v1375
          %v1385 = vadd.f32 %v1347, %v1375
          %v1386 = vadd.f32 %v1348, %v1375
          %v1387 = vadd.f32 %v1349, %v1375
          %v1388 = vadd.f32 %v1350, %v1375
          %v1389 = vadd.f32 %v1351, %v1375
          %v1390 = vadd.f32 %v1352, %v1375
          %v1391 = vadd.f32 %v1353, %v1375
          %v1392 = vadd.f32 %v1354, %v1375
          %v1393 = vadd.f32 %v1355, %v1375
          %v1394 = vadd.f32 %v1356, %v1375
          %v1395 = vadd.f32 %v1357, %v1375
          %v1396 = vadd.f32 %v1358, %v1375
          %v1397 = vadd.f32 %v1359, %v1375
          %v1398 = vadd.f32 %v1360, %v1375
          %v1399 = vadd.f32 %v1361, %v1375
          %v1400 = vadd.f32 %v1362, %v1375
          %v1401 = vadd.f32 %v1363, %v1375
          %v1402 = vadd.f32 %v1364, %v1375
          %v1403 = vadd.f32 %v1365, %v1375
          %v1404 = vadd.f32 %v1366, %v1375
          %v1405 = vadd.f32 %v1367, %v1375
          %v1406 = vadd.f32 %v1368, %v1375
          %v1407 = vadd.f32 %v1369, %v1375
          %v1408 = vadd.f32 %v1370, %v1375
          %v1409 = vmax.f32 %v1377, 0.0
          %v1410 = vmax.f32 %v1378, 0.0
          %v1411 = vmax.f32 %v1379, 0.0
          %v1412 = vmax.f32 %v1380, 0.0
          %v1413 = vmax.f32 %v1381, 0.0
          %v1414 = vmax.f32 %v1382, 0.0
          %v1415 = vmax.f32 %v1383, 0.0
          %v1416 = vmax.f32 %v1384, 0.0
          %v1417 = vmax.f32 %v1385, 0.0
          %v1418 = vmax.f32 %v1386, 0.0
          %v1419 = vmax.f32 %v1387, 0.0
          %v1420 = vmax.f32 %v1388, 0.0
          %v1421 = vmax.f32 %v1389, 0.0
          %v1422 = vmax.f32 %v1390, 0.0
          %v1423 = vmax.f32 %v1391, 0.0
          %v1424 = vmax.f32 %v1392, 0.0
          %v1425 = vmax.f32 %v1393, 0.0
          %v1426 = vmax.f32 %v1394, 0.0
          %v1427 = vmax.f32 %v1395, 0.0
          %v1428 = vmax.f32 %v1396, 0.0
          %v1429 = vmax.f32 %v1397, 0.0
          %v1430 = vmax.f32 %v1398, 0.0
          %v1431 = vmax.f32 %v1399, 0.0
          %v1432 = vmax.f32 %v1400, 0.0
          %v1433 = vmax.f32 %v1401, 0.0
          %v1434 = vmax.f32 %v1402, 0.0
          %v1435 = vmax.f32 %v1403, 0.0
          %v1436 = vmax.f32 %v1404, 0.0
          %v1437 = vmax.f32 %v1405, 0.0
          %v1438 = vmax.f32 %v1406, 0.0
          %v1439 = vmax.f32 %v1407, 0.0
          %v1440 = vmax.f32 %v1408, 0.0
          %v1441 = vmul.f32 %v1409, %v1269
          %v1442 = vmul.f32 %v1410, %v1270
          %v1443 = vmul.f32 %v1411, %v1271
          %v1444 = vmul.f32 %v1412, %v1272
          %v1445 = vmul.f32 %v1413, %v1273
          %v1446 = vmul.f32 %v1414, %v1274
          %v1447 = vmul.f32 %v1415, %v1275
          %v1448 = vmul.f32 %v1416, %v1276
          %v1449 = vmul.f32 %v1417, %v1277
          %v1450 = vmul.f32 %v1418, %v1278
          %v1451 = vmul.f32 %v1419, %v1279
          %v1452 = vmul.f32 %v1420, %v1280
          %v1453 = vmul.f32 %v1421, %v1281
          %v1454 = vmul.f32 %v1422, %v1282
          %v1455 = vmul.f32 %v1423, %v1283
          %v1456 = vmul.f32 %v1424, %v1284
          %v1457 = vmul.f32 %v1425, %v1285
          %v1458 = vmul.f32 %v1426, %v1286
          %v1459 = vmul.f32 %v1427, %v1287
          %v1460 = vmul.f32 %v1428, %v1288
          %v1461 = vmul.f32 %v1429, %v1289
          %v1462 = vmul.f32 %v1430, %v1290
          %v1463 = vmul.f32 %v1431, %v1291
          %v1464 = vmul.f32 %v1432, %v1292
          %v1465 = vmul.f32 %v1433, %v1293
          %v1466 = vmul.f32 %v1434, %v1294
          %v1467 = vmul.f32 %v1435, %v1295
          %v1468 = vmul.f32 %v1436, %v1296
          %v1469 = vmul.f32 %v1437, %v1297
          %v1470 = vmul.f32 %v1438, %v1298
          %v1471 = vmul.f32 %v1439, %v1299
          %v1472 = vmul.f32 %v1440, %v1300
          %1473 = vst [vmem:[#allocation2] sm:$0xff] %v1441
          %1474 = vst [vmem:[#allocation2 + $0x8] sm:$0xff] %v1442
          %1475 = vst [vmem:[#allocation2 + $0x10] sm:$0xff] %v1443
          %1476 = vst [vmem:[#allocation2 + $0x18] sm:$0xff] %v1444
          %1477 = vst [vmem:[#allocation2 + $0x20] sm:$0xff] %v1445
          %1478 = vst [vmem:[#allocation2 + $0x28] sm:$0xff] %v1446
          %1479 = vst [vmem:[#allocation2 + $0x30] sm:$0xff] %v1447
          %1480 = vst [vmem:[#allocation2 + $0x38] sm:$0xff] %v1448
          %1481 = vst [vmem:[#allocation2 + $0x40] sm:$0xff] %v1449
          %1482 = vst [vmem:[#allocation2 + $0x48] sm:$0xff] %v1450
          %1483 = vst [vmem:[#allocation2 + $0x50] sm:$0xff] %v1451
          %1484 = vst [vmem:[#allocation2 + $0x58] sm:$0xff] %v1452
          %1485 = vst [vmem:[#allocation2 + $0x60] sm:$0xff] %v1453
          %1486 = vst [vmem:[#allocation2 + $0x68] sm:$0xff] %v1454
          %1487 = vst [vmem:[#allocation2 + $0x70] sm:$0xff] %v1455
          %1488 = vst [vmem:[#allocation2 + $0x78] sm:$0xff] %v1456
          %1489 = vst [vmem:[#allocation2 + $0x80] sm:$0xff] %v1457
          %1490 = vst [vmem:[#allocation2 + $0x88] sm:$0xff] %v1458
          %1491 = vst [vmem:[#allocation2 + $0x90] sm:$0xff] %v1459
          %1492 = vst [vmem:[#allocation2 + $0x98] sm:$0xff] %v1460
          %1493 = vst [vmem:[#allocation2 + $0xa0] sm:$0xff] %v1461
          %1494 = vst [vmem:[#allocation2 + $0xa8] sm:$0xff] %v1462
          %1495 = vst [vmem:[#allocation2 + $0xb0] sm:$0xff] %v1463
          %1496 = vst [vmem:[#allocation2 + $0xb8] sm:$0xff] %v1464
          %1497 = vst [vmem:[#allocation2 + $0xc0] sm:$0xff] %v1465
          %1498 = vst [vmem:[#allocation2 + $0xc8] sm:$0xff] %v1466
          %1499 = vst [vmem:[#allocation2 + $0xd0] sm:$0xff] %v1467
          %1500 = vst [vmem:[#allocation2 + $0xd8] sm:$0xff] %v1468
          %1501 = vst [vmem:[#allocation2 + $0xe0] sm:$0xff] %v1469
          %1502 = vst [vmem:[#allocation2 + $0xe8] sm:$0xff] %v1470
          %1503 = vst [vmem:[#allocation2 + $0xf0] sm:$0xff] %v1471
          %1504 = vst [vmem:[#allocation2 + $0xf8] sm:$0xff] %v1472
          %v1505 = vld [vmem:[#allocation4] sm:$0xff]
          %v1506 = vld [vmem:[#allocation4 + $0x8] sm:$0xff]
          %1507 = vmatprep.subr.mxu0 0.0
          %1508 = vmatpush1.msra.mxu0 %v1441
          %1509 = vmatprep.subr.mxu0 0.0
          %1510 = vmatpush1.msra.mxu0 %v1442
          %1511 = vmatprep.subr.mxu0 0.0
          %1512 = vmatpush1.msra.mxu0 %v1443
          %1513 = vmatprep.subr.mxu0 0.0
          %1514 = vmatpush1.msra.mxu0 %v1444
          %1515 = vmatprep.subr.mxu0 0.0
          %1516 = vmatpush1.msra.mxu0 %v1445
          %1517 = vmatprep.subr.mxu0 0.0
          %1518 = vmatpush1.msra.mxu0 %v1446
          %1519 = vmatprep.subr.mxu0 0.0
          %1520 = vmatpush1.msra.mxu0 %v1447
          %1521 = vmatprep.subr.mxu0 0.0
          %1522 = vmatpush1.msra.mxu0 %v1448
          %1523 = vmatprep.subr.mxu0 0.0
          %1524 = vmatpush1.msra.mxu0 %v1449
          %1525 = vmatprep.subr.mxu0 0.0
          %1526 = vmatpush1.msra.mxu0 %v1450
          %1527 = vmatprep.subr.mxu0 0.0
          %1528 = vmatpush1.msra.mxu0 %v1451
          %1529 = vmatprep.subr.mxu0 0.0
          %1530 = vmatpush1.msra.mxu0 %v1452
          %1531 = vmatprep.subr.mxu0 0.0
          %1532 = vmatpush1.msra.mxu0 %v1453
          %1533 = vmatprep.subr.mxu0 0.0
          %1534 = vmatpush1.msra.mxu0 %v1454
          %1535 = vmatprep.subr.mxu0 0.0
          %1536 = vmatpush1.msra.mxu0 %v1455
          %1537 = vmatprep.subr.mxu0 0.0
          %1538 = vmatpush1.msra.mxu0 %v1456
          %1539 = vmatprep.subr.mxu0 0.0
          %1540 = vmatpush1.msra.mxu0 %v1457
          %1541 = vmatprep.subr.mxu0 0.0
          %1542 = vmatpush1.msra.mxu0 %v1458
          %1543 = vmatprep.subr.mxu0 0.0
          %1544 = vmatpush1.msra.mxu0 %v1459
          %1545 = vmatprep.subr.mxu0 0.0
          %1546 = vmatpush1.msra.mxu0 %v1460
          %1547 = vmatprep.subr.mxu0 0.0
          %1548 = vmatpush1.msra.mxu0 %v1461
          %1549 = vmatprep.subr.mxu0 0.0
          %1550 = vmatpush1.msra.mxu0 %v1462
          %1551 = vmatprep.subr.mxu0 0.0
          %1552 = vmatpush1.msra.mxu0 %v1463
          %1553 = vmatprep.subr.mxu0 0.0
          %1554 = vmatpush1.msra.mxu0 %v1464
          %1555 = vmatprep.subr.mxu0 0.0
          %1556 = vmatpush1.msra.mxu0 %v1465
          %1557 = vmatprep.subr.mxu0 0.0
          %1558 = vmatpush1.msra.mxu0 %v1466
          %1559 = vmatprep.subr.mxu0 0.0
          %1560 = vmatpush1.msra.mxu0 %v1467
          %1561 = vmatprep.subr.mxu0 0.0
          %1562 = vmatpush1.msra.mxu0 %v1468
          %1563 = vmatprep.subr.mxu0 0.0
          %1564 = vmatpush1.msra.mxu0 %v1469
          %1565 = vmatprep.subr.mxu0 0.0
          %1566 = vmatpush1.msra.mxu0 %v1470
          %1567 = vmatprep.subr.mxu0 0.0
          %1568 = vmatpush1.msra.mxu0 %v1471
          %1569 = vmatprep.subr.mxu0 0.0
          %1570 = vmatpush1.msra.mxu0 %v1472
          %1571 = vmatprep.mubr.f32.mxu0 %v1506
          %1572 = vmatmul.mubr.f32.gmra.mrb[0].mxu0 %v1505
          %v1573 = vpop.f32.mrb[0].mxu0
          %v1574 = vadd.f32 0.0, %v1573
          %v1575 = vpop.f32.mrb[0].mxu0
          %1576 = vdwg.mxu0
          %s1577 = sadd.s32 %s30, 1
          %s1578 = smul.u32 %s1577, 8
          %s1579 = scalar_lea.vmem [#allocation14], %s1578
          %1580 = vst [vmem:[%s1579] sm:$0xff] %v1574
        $region80: #{tpu_custom_call.1} parent=39 // pred_fallthru
          _
        // Predicated region
        $region81: #{tpu_custom_call.1} parent=39 // pred_check
          %p1581 = pneg %p189
        $region82: #{tpu_custom_call.1} parent=39 // pred_check_branch
          %1583 = sbr.rel (%p1581) target = $region84
        $region83: #{tpu_custom_call.1} parent=39 // pred_region
          %s1585 = ssub.s32 384, 384
          %1586 = vsyncadd [#allocation11], %s1585
          %s1587 = sshll.u32 [#allocation14], 4
          %s1588 = int_to_ptr.vmem [resolvable:$true] %s1587
          %1593 = dma.vmem_to_hbm [thread:$0]  %s1588, 384, %s7, [#allocation11], 128, 128, 8
        $region84: #{tpu_custom_call.1} parent=39 // pred_fallthru
          _
        // Predicated region
        $region85: #{tpu_custom_call.1} parent=39 // pred_check
          %p1594 = pneg %p189
        $region86: #{tpu_custom_call.1} parent=39 // pred_check_branch
          %1596 = sbr.rel (%p1594) target = $region88
        $region87: #{tpu_custom_call.1} parent=39 // pred_region
          %1597 = dma.done [#allocation11], 384
        $region88: #{tpu_custom_call.1} parent=39 // pred_fallthru
          _
      $region40: #{tpu_custom_call.1} parent=5 // pred_fallthru
        _
      %p1598 = scmp.le.s32.totalorder 2, %s20
      // Predicated region
      $region89: #{tpu_custom_call.1} parent=5 // pred_check
        %p1599 = pneg %p1598
      $region90: #{tpu_custom_call.1} parent=5 // pred_check_branch
        %1601 = sbr.rel (%p1599) target = $region92
      $region91: #{tpu_custom_call.1} parent=5 // pred_region
        %s1602 = ssub.s32 %s20, 2
      $region92: #{tpu_custom_call.1} parent=5 // pred_fallthru
        _
    $region6: #{tpu_custom_call.1} parent=1 // loop_footer
      %s24 = sadd.s32 1, %s20
    $region7: #{tpu_custom_call.1} parent=1 // loop_footer_branch
      %19 = sbr.rel target = $region3
    $region8: #{tpu_custom_call.1} parent=1 // loop_exit
      _
    %1603 = vsyncpa [#allocation10], 1
    %s1604 = scalar_lea.sflag [#allocation10], 1
    %1605 = vsyncpa %s1604, 1
    %1606 = vsyncpa [#allocation13], 1
    %s1607 = scalar_lea.sflag [#allocation13], 1
    %1608 = vsyncpa %s1607, 1
    %1609 = vsyncpa [#allocation11], 1
    %s1610 = scalar_lea.sflag [#allocation11], 1
    %1611 = vsyncpa %s1610, 1
  %1612 = vsyncmov [#allocation8]
  %s1613 = vpop.sfrf %1612
  %p1614 = scmp.eq.s32.totalorder %s1613, 0
  %p1615 = pneg %p1614
  %1617 = shalt.err (%p1615)
  %s1618 = scalar_lea.sflag [#allocation8], 1
  %1619 = vsyncmov %s1618
  %s1620 = vpop.sfrf %1619
  %p1621 = scmp.eq.s32.totalorder %s1620, 0
  %p1622 = pneg %p1621
  %1624 = shalt.err (%p1622)

</llo_original>
